<compile_context>
chip_gen: v5e
topology: v5e:2x2
jax: 0.10.0
libtpu: 0.0.40
codegen_flags: <defaults>
</compile_context>

<pallas_src>
import functools

import jax
import jax.numpy as jnp
import numpy as np
from jax.experimental import pallas as pl
from jax.experimental.pallas import tpu as pltpu

LN_EPS = 1e-5
BN_EPS = 1e-5

# Rows of the stacked per-channel parameter matrix handed to the kernel.
_ROW_LN_G, _ROW_LN_B = 0, 1
_ROW_B1A, _ROW_B1B = 2, 3
_ROW_W2_0, _ROW_W2_1, _ROW_W2_2 = 4, 5, 6
_ROW_B2F, _ROW_B3 = 7, 8
_NUM_VEC_ROWS = 9


def conv_module_kernel(x_ref,        # (1, tT, D)   main time tile
                       xprev_ref,    # (1, 8, D)    block holding row tile_start-1 (sublane 7)
                       xnext_ref,    # (1, 8, D)    block holding row tile_end     (sublane 0)
                       vec_ref,      # (9, D)       stacked per-channel vectors (f32, whole-array VMEM)
                       w1t_ref,      # (D, 2D)      fused pointwise conv1 weight (bf16, whole-array VMEM)
                       w3t_ref,      # (D, D)       pointwise conv3 weight (bf16, whole-array VMEM)
                       o_ref):       # (1, tT, D)
    t = pl.program_id(1)
    n_t = pl.num_programs(1)
    tT = x_ref.shape[1]
    D = x_ref.shape[2]

    ln_g = vec_ref[_ROW_LN_G:_ROW_LN_G + 1, :]
    ln_b = vec_ref[_ROW_LN_B:_ROW_LN_B + 1, :]
    b1a = vec_ref[_ROW_B1A:_ROW_B1A + 1, :]
    b1b = vec_ref[_ROW_B1B:_ROW_B1B + 1, :]
    w2_0 = vec_ref[_ROW_W2_0:_ROW_W2_0 + 1, :]
    w2_1 = vec_ref[_ROW_W2_1:_ROW_W2_1 + 1, :]
    w2_2 = vec_ref[_ROW_W2_2:_ROW_W2_2 + 1, :]
    b2f = vec_ref[_ROW_B2F:_ROW_B2F + 1, :]
    b3 = vec_ref[_ROW_B3:_ROW_B3 + 1, :]

    def ln_conv1_glu(rows):
        """LayerNorm -> fused pointwise conv1 (D->2D) -> GLU on an (n, D) slab."""
        mean = jnp.mean(rows, axis=-1, keepdims=True)
        xc = rows - mean
        var = jnp.mean(xc * xc, axis=-1, keepdims=True)
        y = xc * jax.lax.rsqrt(var + LN_EPS) * ln_g + ln_b
        h = jnp.dot(y.astype(jnp.bfloat16), w1t_ref[...],
                    preferred_element_type=jnp.float32)        # (n, 2D), MXU
        a = h[:, :D] + b1a
        gate = h[:, D:] + b1b
        return a * jax.nn.sigmoid(gate)                        # (n, D) f32

    # ---- main tile: all ops stay on the aligned (tT, D) block ----
    g = ln_conv1_glu(x_ref[0].astype(jnp.float32))             # (tT, D)

    # ---- halo rows (tile_start-1, tile_end): tiny 2-row recompute ----
    x_halo = jnp.concatenate(
        [xprev_ref[0, 7:8, :], xnext_ref[0, 0:1, :]], axis=0).astype(jnp.float32)
    g_halo = ln_conv1_glu(x_halo)                              # (2, D)
    not_first = (t > 0).astype(jnp.float32)
    not_last = (t < n_t - 1).astype(jnp.float32)
    g_top = g_halo[0:1, :] * not_first     # zero padding at the true sequence start
    g_bot = g_halo[1:2, :] * not_last      # zero padding at the true sequence end

    # ---- depthwise conv k=3, pad=1 (BatchNorm folded into taps/bias) ----
    # Shifted copies via XLU sublane rolls on the aligned tile; the wrapped row
    # is replaced with the halo row (already masked at sequence edges).
    row = jax.lax.broadcasted_iota(jnp.int32, (tT, 1), 0)
    g_prev = jnp.where(row == 0, g_top, pltpu.roll(g, 1, axis=0))            # rows i-1
    g_next = jnp.where(row == tT - 1, g_bot, pltpu.roll(g, tT - 1, axis=0))  # rows i+1
    dw = g_prev * w2_0 + g * w2_1 + g_next * w2_2 + b2f

    # ---- SiLU / swish (f32: v5e's VPU/EUP are f32-only; hidden under DMA) ----
    sw = dw * jax.nn.sigmoid(dw)

    # ---- pointwise conv3 (D -> D) ----
    out = jnp.dot(sw.astype(jnp.bfloat16), w3t_ref[...],
                  preferred_element_type=jnp.float32) + b3

    # ---- dropout: identity in eval mode ----
    o_ref[0] = out.astype(o_ref.dtype)


def _is_v7x():
    try:
        return "v7" in jax.devices()[0].device_kind.lower()
    except Exception:
        return False


def _pick_t_tile(B, T, D, in_dtype, out_dtype, v7x):
    """Byte-aware time-tile selection.

    Targets ~6 MiB of main-tile HBM I/O per grid step (amortizing the ~0.35 us
    fixed per-step overhead), capped by a VMEM working-set budget (tighter on
    v7x's 64 MiB VMEM) and by keeping >= 4 grid steps so megacore / v7x's two
    TensorCores both get work.  Returns a multiple-of-8 divisor of T.
    """
    in_b = jnp.dtype(in_dtype).itemsize
    out_b = jnp.dtype(out_dtype).itemsize
    io_per_row = D * (in_b + out_b)
    # Rough live-VMEM bytes per tile row: double-buffered in/out rows, the
    # (tT, 2D) f32 conv1 output, and ~5 f32 (tT, D) temporaries.
    work_per_row = D * (2 * in_b + 2 * out_b + 8 + 5 * 4)
    param_bytes = D * (2 * D) * 2 + D * D * 2 + _NUM_VEC_ROWS * D * 4
    vmem_budget = (16 if v7x else 40) * 1024 * 1024
    io_target = 6 * 1024 * 1024
    cap = min(io_target // max(io_per_row, 1),
              max((vmem_budget - param_bytes) // max(work_per_row, 1), 8),
              T)
    if B < 4:  # keep at least ~4 parallel grid steps per chip
        cap = min(cap, max(T * B // 4, 8))
    cap = max(8, cap - (cap % 8))
    for tt in range(int(cap), 7, -8):
        if T % tt == 0:
            return tt
    return 8  # T is a multiple of 8, so 8 always divides


@functools.partial(jax.jit, static_argnames=("t_tile", "out_dtype"))
def conv_module_forward(x, params, t_tile=None, out_dtype=None):
    B, T, D = x.shape
    if T % 8 != 0:
        raise ValueError("T must be a multiple of 8 (pad at the caller).")
    out_dt = jnp.dtype(x.dtype) if out_dtype is None else jnp.dtype(out_dtype)
    v7x = _is_v7x()
    tT = _pick_t_tile(B, T, D, x.dtype, out_dt, v7x) if t_tile is None else int(t_tile)
    if tT % 8 != 0 or T % tT != 0:
        raise ValueError("t_tile must be a multiple of 8 that divides T.")
    n_t = T // tT
    tb8 = tT // 8
    blk8 = T // 8

    # Fold eval-mode BatchNorm into the depthwise conv.
    scale = params["bn_g"] * jax.lax.rsqrt(params["bn_rv"] + BN_EPS)   # (D,)
    w2f = params["w2"] * scale[None, :]                                 # (3, D)
    b2f = (params["b2"] - params["bn_rm"]) * scale + params["bn_b"]     # (D,)

    # Stack every per-channel vector into one (9, D) array -> single copy.
    vecs = jnp.stack(
        [params["ln_g"], params["ln_b"],
         params["b1"][:D], params["b1"][D:],
         w2f[0], w2f[1], w2f[2], b2f, params["b3"]],
        axis=0).astype(jnp.float32)

    # Pointwise weights go to the MXU in bf16 (f32 accumulation in-kernel).
    w1t = params["w1_t"].astype(jnp.bfloat16)   # (D, 2D)
    w3t = params["w3_t"].astype(jnp.bfloat16)   # (D, D)

    in_specs = [
        # main time tile
        pl.BlockSpec((1, tT, D), lambda b, t: (b, t, 0)),
        # 8-row block containing the row just before the tile (clamped at t=0)
        pl.BlockSpec((1, 8, D),
                     lambda b, t: (b, jnp.maximum(t * tb8 - 1, 0), 0)),
        # 8-row block containing the row just after the tile (clamped at end)
        pl.BlockSpec((1, 8, D),
                     lambda b, t: (b, jnp.minimum((t + 1) * tb8, blk8 - 1), 0)),
        # grid-invariant parameters: whole-array, single-buffered, in VMEM
        pl.BlockSpec(memory_space=pltpu.MemorySpace.VMEM),   # vecs
        pl.BlockSpec(memory_space=pltpu.MemorySpace.VMEM),   # w1t
        pl.BlockSpec(memory_space=pltpu.MemorySpace.VMEM),   # w3t
    ]

    # Advisory cost estimate so XLA can overlap neighbours with this
    # memory-bound custom call.
    flops = 2 * B * T * D * (3 * D) + 16 * B * T * D
    transcendentals = 2 * B * T * D
    bytes_accessed = (B * T * D * (jnp.dtype(x.dtype).itemsize + out_dt.itemsize)
                      + w1t.size * 2 + w3t.size * 2 + vecs.size * 4)

    out = pl.pallas_call(
        conv_module_kernel,
        out_shape=jax.ShapeDtypeStruct((B, T, D), out_dt),
        grid_spec=pltpu.PrefetchScalarGridSpec(
            num_scalar_prefetch=0,
            grid=(B, n_t),
            in_specs=in_specs,
            out_specs=pl.BlockSpec((1, tT, D), lambda b, t: (b, t, 0)),
        ),
        compiler_params=pltpu.CompilerParams(
            dimension_semantics=("parallel", "parallel"),
            vmem_limit_bytes=(32 if v7x else 64) * 1024 * 1024),
        cost_estimate=pl.CostEstimate(
            flops=int(flops),
            transcendentals=int(transcendentals),
            bytes_accessed=int(bytes_accessed)),
    )(x, x, x, vecs, w1t, w3t)
    return out


def init_params(key, D):
    """Parameters in math-friendly layout.

    Mapping from the PyTorch module:
      w1_t = conv1.weight[:, :, 0].T   (D, 2D)     b1 = conv1.bias   (2D,)
      w2[k, c] = conv2.weight[c, 0, k] (3, D)      b2 = conv2.bias   (D,)
      w3_t = conv3.weight[:, :, 0].T   (D, D)      b3 = conv3.bias   (D,)
    """
    ks = jax.random.split(key, 12)
    s = 0.1
    return {
        "ln_g": 1.0 + s * jax.random.normal(ks[0], (D,), jnp.float32),
        "ln_b": s * jax.random.normal(ks[1], (D,), jnp.float32),
        "w1_t": s * jax.random.normal(ks[2], (D, 2 * D), jnp.float32),
        "b1":   s * jax.random.normal(ks[3], (2 * D,), jnp.float32),
        "w2":   s * jax.random.normal(ks[4], (3, D), jnp.float32),
        "b2":   s * jax.random.normal(ks[5], (D,), jnp.float32),
        "bn_g": 1.0 + s * jax.random.normal(ks[6], (D,), jnp.float32),
        "bn_b": s * jax.random.normal(ks[7], (D,), jnp.float32),
        "bn_rm": jnp.zeros((D,), jnp.float32),
        "bn_rv": jnp.ones((D,), jnp.float32),
        "w3_t": s * jax.random.normal(ks[8], (D, D), jnp.float32),
        "b3":   s * jax.random.normal(ks[9], (D,), jnp.float32),
    }


def reference_forward(x, p):
    """Pure-JAX f32 reference with the PyTorch module's semantics, (B,T,D)."""
    D = x.shape[-1]
    mean = x.mean(-1, keepdims=True)
    var = ((x - mean) ** 2).mean(-1, keepdims=True)
    y = (x - mean) / jnp.sqrt(var + LN_EPS) * p["ln_g"] + p["ln_b"]
    h = y @ p["w1_t"] + p["b1"]
    g = h[..., :D] * jax.nn.sigmoid(h[..., D:])
    gp = jnp.pad(g, ((0, 0), (1, 1), (0, 0)))
    dw = (gp[:, :-2] * p["w2"][0] + gp[:, 1:-1] * p["w2"][1]
          + gp[:, 2:] * p["w2"][2] + p["b2"])
    bn = (dw - p["bn_rm"]) / jnp.sqrt(p["bn_rv"] + BN_EPS)
    bn = bn * p["bn_g"] + p["bn_b"]
    sw = bn * jax.nn.sigmoid(bn)
    return sw @ p["w3_t"] + p["b3"]


if __name__ == "__main__":
    # Small but lane-aligned shapes: D is a multiple of 128; the byte-aware
    # tile picker splits T=128 into two time tiles (B*n_t >= 4), which also
    # exercises the cross-tile halo path of the depthwise conv.
    B, T, D = 2, 128, 128
    key = jax.random.PRNGKey(0)
    kx, kp = jax.random.split(key)
    x = jax.random.normal(kx, (B, T, D), jnp.float32)   # (batch, seq, input_dim)
    params = init_params(kp, D)

    out = conv_module_forward(x, params)
    out = jax.block_until_ready(out)

    ref = reference_forward(x, params)
    # Tolerance accounts for bf16 MXU inputs (f32 accumulation) in the kernel.
    np.testing.assert_allclose(np.asarray(out), np.asarray(ref),
                               rtol=2e-2, atol=2e-2)
    print("KERNEL_OK")
</pallas_src>

<mosaic_0001>
module attributes {stable_mosaic.version = 11 : i64} {
  func.func @conv_module_kernel(%arg0: i32, %arg1: i32, %arg2: memref<1x64x128xf32, #tpu.memory_space<vmem>>, %arg3: memref<1x8x128xf32, #tpu.memory_space<vmem>>, %arg4: memref<1x8x128xf32, #tpu.memory_space<vmem>>, %arg5: memref<9x128xf32, #tpu.memory_space<vmem>>, %arg6: memref<128x256xbf16, #tpu.memory_space<vmem>>, %arg7: memref<128x128xbf16, #tpu.memory_space<vmem>>, %arg8: memref<1x64x128xf32, #tpu.memory_space<vmem>>) attributes {dimension_semantics = [#tpu.dimension_semantics<parallel>, #tpu.dimension_semantics<parallel>], iteration_bounds = array<i64: 2, 2>, scalar_prefetch = 0 : i64, scratch_operands = 0 : i64, tpu.core_type = #tpu.core_type<tc>, window_params = [{transform_indices = @transform_0, window_bounds = array<i64: 1, 64, 128>}, {transform_indices = @transform_1, window_bounds = array<i64: 1, 8, 128>}, {transform_indices = @transform_2, window_bounds = array<i64: 1, 8, 128>}, {pipeline_mode = #tpu.pipeline_mode<synchronous>, transform_indices = @transform_3, window_bounds = array<i64: 9, 128>}, {pipeline_mode = #tpu.pipeline_mode<synchronous>, transform_indices = @transform_4, window_bounds = array<i64: 128, 256>}, {pipeline_mode = #tpu.pipeline_mode<synchronous>, transform_indices = @transform_5, window_bounds = array<i64: 128, 128>}, {transform_indices = @transform_6, window_bounds = array<i64: 1, 64, 128>}]} {
    %c0 = arith.constant 0 : index
    %c0_0 = arith.constant 0 : index
    %0 = vector.load %arg5[%c0, %c0_0] : memref<9x128xf32, #tpu.memory_space<vmem>>, vector<1x128xf32>
    %c1 = arith.constant 1 : index
    %c0_1 = arith.constant 0 : index
    %1 = vector.load %arg5[%c1, %c0_1] : memref<9x128xf32, #tpu.memory_space<vmem>>, vector<1x128xf32>
    %c2 = arith.constant 2 : index
    %c0_2 = arith.constant 0 : index
    %2 = vector.load %arg5[%c2, %c0_2] : memref<9x128xf32, #tpu.memory_space<vmem>>, vector<1x128xf32>
    %c3 = arith.constant 3 : index
    %c0_3 = arith.constant 0 : index
    %3 = vector.load %arg5[%c3, %c0_3] : memref<9x128xf32, #tpu.memory_space<vmem>>, vector<1x128xf32>
    %c4 = arith.constant 4 : index
    %c0_4 = arith.constant 0 : index
    %4 = vector.load %arg5[%c4, %c0_4] : memref<9x128xf32, #tpu.memory_space<vmem>>, vector<1x128xf32>
    %c5 = arith.constant 5 : index
    %c0_5 = arith.constant 0 : index
    %5 = vector.load %arg5[%c5, %c0_5] : memref<9x128xf32, #tpu.memory_space<vmem>>, vector<1x128xf32>
    %c6 = arith.constant 6 : index
    %c0_6 = arith.constant 0 : index
    %6 = vector.load %arg5[%c6, %c0_6] : memref<9x128xf32, #tpu.memory_space<vmem>>, vector<1x128xf32>
    %c7 = arith.constant 7 : index
    %c0_7 = arith.constant 0 : index
    %7 = vector.load %arg5[%c7, %c0_7] : memref<9x128xf32, #tpu.memory_space<vmem>>, vector<1x128xf32>
    %c8 = arith.constant 8 : index
    %c0_8 = arith.constant 0 : index
    %8 = vector.load %arg5[%c8, %c0_8] : memref<9x128xf32, #tpu.memory_space<vmem>>, vector<1x128xf32>
    %c0_9 = arith.constant 0 : index
    %c0_10 = arith.constant 0 : index
    %c0_11 = arith.constant 0 : index
    %9 = vector.load %arg2[%c0_9, %c0_10, %c0_11] : memref<1x64x128xf32, #tpu.memory_space<vmem>>, vector<1x64x128xf32>
    %10 = vector.shape_cast %9 : vector<1x64x128xf32> to vector<64x128xf32>
    %cst = arith.constant dense<0.000000e+00> : vector<64xf32>
    %11 = vector.multi_reduction <add>, %10, %cst [1] : vector<64x128xf32> to vector<64xf32>
    %12 = vector.shape_cast %11 : vector<64xf32> to vector<64x1xf32>
    %cst_12 = arith.constant 1.280000e+02 : f32
    %13 = vector.broadcast %cst_12 : f32 to vector<64x1xf32>
    %14 = arith.divf %12, %13 : vector<64x1xf32>
    %15 = vector.broadcast %14 : vector<64x1xf32> to vector<64x128xf32>
    %16 = arith.subf %10, %15 : vector<64x128xf32>
    %17 = arith.mulf %16, %16 : vector<64x128xf32>
    %cst_13 = arith.constant dense<0.000000e+00> : vector<64xf32>
    %18 = vector.multi_reduction <add>, %17, %cst_13 [1] : vector<64x128xf32> to vector<64xf32>
    %19 = vector.shape_cast %18 : vector<64xf32> to vector<64x1xf32>
    %cst_14 = arith.constant 1.280000e+02 : f32
    %20 = vector.broadcast %cst_14 : f32 to vector<64x1xf32>
    %21 = arith.divf %19, %20 : vector<64x1xf32>
    %cst_15 = arith.constant 9.99999974E-6 : f32
    %22 = vector.broadcast %cst_15 : f32 to vector<64x1xf32>
    %23 = arith.addf %21, %22 : vector<64x1xf32>
    %24 = math.rsqrt %23 : vector<64x1xf32>
    %25 = vector.broadcast %24 : vector<64x1xf32> to vector<64x128xf32>
    %26 = arith.mulf %16, %25 : vector<64x128xf32>
    %27 = vector.broadcast %0 : vector<1x128xf32> to vector<64x128xf32>
    %28 = arith.mulf %26, %27 : vector<64x128xf32>
    %29 = vector.broadcast %1 : vector<1x128xf32> to vector<64x128xf32>
    %30 = arith.addf %28, %29 : vector<64x128xf32>
    %31 = arith.truncf %30 : vector<64x128xf32> to vector<64x128xbf16>
    %c0_16 = arith.constant 0 : index
    %c0_17 = arith.constant 0 : index
    %32 = vector.load %arg6[%c0_16, %c0_17] : memref<128x256xbf16, #tpu.memory_space<vmem>>, vector<128x256xbf16>
    %cst_18 = arith.constant dense<0.000000e+00> : vector<64x256xf32>
    %33 = tpu.matmul %31, %32, %cst_18 {dimension_numbers = #tpu.dot_dimension_numbers<[1], [0], [0], [1], [0, 0, 1, 1], [], []>} : vector<64x128xbf16>, vector<128x256xbf16>, vector<64x256xf32> -> vector<64x256xf32>
    %34 = vector.extract_strided_slice %33 {offsets = [0, 0], sizes = [64, 128], strides = [1, 1]} : vector<64x256xf32> to vector<64x128xf32>
    %35 = vector.broadcast %2 : vector<1x128xf32> to vector<64x128xf32>
    %36 = arith.addf %34, %35 : vector<64x128xf32>
    %37 = vector.extract_strided_slice %33 {offsets = [0, 128], sizes = [64, 128], strides = [1, 1]} : vector<64x256xf32> to vector<64x128xf32>
    %38 = vector.broadcast %3 : vector<1x128xf32> to vector<64x128xf32>
    %39 = arith.addf %37, %38 : vector<64x128xf32>
    %40 = arith.negf %39 : vector<64x128xf32>
    %41 = math.exp %40 : vector<64x128xf32>
    %cst_19 = arith.constant 1.000000e+00 : f32
    %42 = vector.broadcast %cst_19 : f32 to vector<64x128xf32>
    %43 = arith.addf %42, %41 : vector<64x128xf32>
    %44 = arith.divf %42, %43 : vector<64x128xf32>
    %45 = arith.mulf %36, %44 : vector<64x128xf32>
    %c0_20 = arith.constant 0 : index
    %c7_21 = arith.constant 7 : index
    %c0_22 = arith.constant 0 : index
    %46 = vector.load %arg3[%c0_20, %c7_21, %c0_22] : memref<1x8x128xf32, #tpu.memory_space<vmem>>, vector<1x1x128xf32>
    %47 = vector.shape_cast %46 : vector<1x1x128xf32> to vector<1x128xf32>
    %c0_23 = arith.constant 0 : index
    %c0_24 = arith.constant 0 : index
    %c0_25 = arith.constant 0 : index
    %48 = vector.load %arg4[%c0_23, %c0_24, %c0_25] : memref<1x8x128xf32, #tpu.memory_space<vmem>>, vector<1x1x128xf32>
    %49 = vector.shape_cast %48 : vector<1x1x128xf32> to vector<1x128xf32>
    %50 = tpu.concatenate %47, %49 in 0 : vector<1x128xf32>, vector<1x128xf32> -> vector<2x128xf32>
    %cst_26 = arith.constant dense<0.000000e+00> : vector<2xf32>
    %51 = vector.multi_reduction <add>, %50, %cst_26 [1] : vector<2x128xf32> to vector<2xf32>
    %52 = vector.shape_cast %51 : vector<2xf32> to vector<2x1xf32>
    %cst_27 = arith.constant 1.280000e+02 : f32
    %53 = vector.broadcast %cst_27 : f32 to vector<2x1xf32>
    %54 = arith.divf %52, %53 : vector<2x1xf32>
    %55 = vector.broadcast %54 : vector<2x1xf32> to vector<2x128xf32>
    %56 = arith.subf %50, %55 : vector<2x128xf32>
    %57 = arith.mulf %56, %56 : vector<2x128xf32>
    %cst_28 = arith.constant dense<0.000000e+00> : vector<2xf32>
    %58 = vector.multi_reduction <add>, %57, %cst_28 [1] : vector<2x128xf32> to vector<2xf32>
    %59 = vector.shape_cast %58 : vector<2xf32> to vector<2x1xf32>
    %cst_29 = arith.constant 1.280000e+02 : f32
    %60 = vector.broadcast %cst_29 : f32 to vector<2x1xf32>
    %61 = arith.divf %59, %60 : vector<2x1xf32>
    %cst_30 = arith.constant 9.99999974E-6 : f32
    %62 = vector.broadcast %cst_30 : f32 to vector<2x1xf32>
    %63 = arith.addf %61, %62 : vector<2x1xf32>
    %64 = math.rsqrt %63 : vector<2x1xf32>
    %65 = vector.broadcast %64 : vector<2x1xf32> to vector<2x128xf32>
    %66 = arith.mulf %56, %65 : vector<2x128xf32>
    %67 = vector.broadcast %0 : vector<1x128xf32> to vector<2x128xf32>
    %68 = arith.mulf %66, %67 : vector<2x128xf32>
    %69 = vector.broadcast %1 : vector<1x128xf32> to vector<2x128xf32>
    %70 = arith.addf %68, %69 : vector<2x128xf32>
    %71 = arith.truncf %70 : vector<2x128xf32> to vector<2x128xbf16>
    %c0_31 = arith.constant 0 : index
    %c0_32 = arith.constant 0 : index
    %72 = vector.load %arg6[%c0_31, %c0_32] : memref<128x256xbf16, #tpu.memory_space<vmem>>, vector<128x256xbf16>
    %cst_33 = arith.constant dense<0.000000e+00> : vector<2x256xf32>
    %73 = tpu.matmul %71, %72, %cst_33 {dimension_numbers = #tpu.dot_dimension_numbers<[1], [0], [0], [1], [0, 0, 1, 1], [], []>} : vector<2x128xbf16>, vector<128x256xbf16>, vector<2x256xf32> -> vector<2x256xf32>
    %74 = vector.extract_strided_slice %73 {offsets = [0, 0], sizes = [2, 128], strides = [1, 1]} : vector<2x256xf32> to vector<2x128xf32>
    %75 = vector.broadcast %2 : vector<1x128xf32> to vector<2x128xf32>
    %76 = arith.addf %74, %75 : vector<2x128xf32>
    %77 = vector.extract_strided_slice %73 {offsets = [0, 128], sizes = [2, 128], strides = [1, 1]} : vector<2x256xf32> to vector<2x128xf32>
    %78 = vector.broadcast %3 : vector<1x128xf32> to vector<2x128xf32>
    %79 = arith.addf %77, %78 : vector<2x128xf32>
    %80 = arith.negf %79 : vector<2x128xf32>
    %81 = math.exp %80 : vector<2x128xf32>
    %cst_34 = arith.constant 1.000000e+00 : f32
    %82 = vector.broadcast %cst_34 : f32 to vector<2x128xf32>
    %83 = arith.addf %82, %81 : vector<2x128xf32>
    %84 = arith.divf %82, %83 : vector<2x128xf32>
    %85 = arith.mulf %76, %84 : vector<2x128xf32>
    %c0_i32 = arith.constant 0 : i32
    %86 = arith.cmpi sgt, %arg1, %c0_i32 : i32
    %87 = arith.extui %86 : i1 to i32
    %88 = arith.sitofp %87 : i32 to f32
    %c1_i32 = arith.constant 1 : i32
    %89 = arith.cmpi slt, %arg1, %c1_i32 : i32
    %90 = arith.extui %89 : i1 to i32
    %91 = arith.sitofp %90 : i32 to f32
    %92 = vector.extract_strided_slice %85 {offsets = [0, 0], sizes = [1, 128], strides = [1, 1]} : vector<2x128xf32> to vector<1x128xf32>
    %93 = vector.broadcast %88 : f32 to vector<1x128xf32>
    %94 = arith.mulf %92, %93 : vector<1x128xf32>
    %95 = vector.extract_strided_slice %85 {offsets = [1, 0], sizes = [1, 128], strides = [1, 1]} : vector<2x128xf32> to vector<1x128xf32>
    %96 = vector.broadcast %91 : f32 to vector<1x128xf32>
    %97 = arith.mulf %95, %96 : vector<1x128xf32>
    %98 = tpu.iota {dimensions = array<i32: 0>} : vector<64x1xi32>
    %c0_i32_35 = arith.constant 0 : i32
    %99 = vector.broadcast %c0_i32_35 : i32 to vector<64x1xi32>
    %100 = arith.cmpi eq, %98, %99 : vector<64x1xi32>
    %c1_i32_36 = arith.constant 1 : i32
    %101 = tpu.dynamic_rotate %45 by %c1_i32_36 dim 0 : vector<64x128xf32>, i32 -> vector<64x128xf32>
    %102 = vector.shape_cast %100 : vector<64x1xi1> to vector<64x1xi1>
    %103 = vector.broadcast %102 : vector<64x1xi1> to vector<64x128xi1>
    %104 = vector.shape_cast %94 : vector<1x128xf32> to vector<1x128xf32>
    %105 = vector.broadcast %104 : vector<1x128xf32> to vector<64x128xf32>
    %106 = arith.select %103, %105, %101 : vector<64x128xi1>, vector<64x128xf32>
    %c63_i32 = arith.constant 63 : i32
    %107 = vector.broadcast %c63_i32 : i32 to vector<64x1xi32>
    %108 = arith.cmpi eq, %98, %107 : vector<64x1xi32>
    %c63_i32_37 = arith.constant 63 : i32
    %109 = tpu.dynamic_rotate %45 by %c63_i32_37 dim 0 : vector<64x128xf32>, i32 -> vector<64x128xf32>
    %110 = vector.shape_cast %108 : vector<64x1xi1> to vector<64x1xi1>
    %111 = vector.broadcast %110 : vector<64x1xi1> to vector<64x128xi1>
    %112 = vector.shape_cast %97 : vector<1x128xf32> to vector<1x128xf32>
    %113 = vector.broadcast %112 : vector<1x128xf32> to vector<64x128xf32>
    %114 = arith.select %111, %113, %109 : vector<64x128xi1>, vector<64x128xf32>
    %115 = vector.broadcast %4 : vector<1x128xf32> to vector<64x128xf32>
    %116 = arith.mulf %106, %115 : vector<64x128xf32>
    %117 = vector.broadcast %5 : vector<1x128xf32> to vector<64x128xf32>
    %118 = arith.mulf %45, %117 : vector<64x128xf32>
    %119 = arith.addf %116, %118 : vector<64x128xf32>
    %120 = vector.broadcast %6 : vector<1x128xf32> to vector<64x128xf32>
    %121 = arith.mulf %114, %120 : vector<64x128xf32>
    %122 = arith.addf %119, %121 : vector<64x128xf32>
    %123 = vector.broadcast %7 : vector<1x128xf32> to vector<64x128xf32>
    %124 = arith.addf %122, %123 : vector<64x128xf32>
    %125 = arith.negf %124 : vector<64x128xf32>
    %126 = math.exp %125 : vector<64x128xf32>
    %cst_38 = arith.constant 1.000000e+00 : f32
    %127 = vector.broadcast %cst_38 : f32 to vector<64x128xf32>
    %128 = arith.addf %127, %126 : vector<64x128xf32>
    %129 = arith.divf %127, %128 : vector<64x128xf32>
    %130 = arith.mulf %124, %129 : vector<64x128xf32>
    %131 = arith.truncf %130 : vector<64x128xf32> to vector<64x128xbf16>
    %c0_39 = arith.constant 0 : index
    %c0_40 = arith.constant 0 : index
    %132 = vector.load %arg7[%c0_39, %c0_40] : memref<128x128xbf16, #tpu.memory_space<vmem>>, vector<128x128xbf16>
    %cst_41 = arith.constant dense<0.000000e+00> : vector<64x128xf32>
    %133 = tpu.matmul %131, %132, %cst_41 {dimension_numbers = #tpu.dot_dimension_numbers<[1], [0], [0], [1], [0, 0, 1, 1], [], []>} : vector<64x128xbf16>, vector<128x128xbf16>, vector<64x128xf32> -> vector<64x128xf32>
    %134 = vector.broadcast %8 : vector<1x128xf32> to vector<64x128xf32>
    %135 = arith.addf %133, %134 : vector<64x128xf32>
    %c0_42 = arith.constant 0 : index
    %c0_43 = arith.constant 0 : index
    %c0_44 = arith.constant 0 : index
    %136 = vector.load %arg8[%c0_42, %c0_43, %c0_44] : memref<1x64x128xf32, #tpu.memory_space<vmem>>, vector<1x64x128xf32>
    %137 = vector.shape_cast %136 : vector<1x64x128xf32> to vector<64x128xf32>
    %138 = vector.shape_cast %135 : vector<64x128xf32> to vector<1x64x128xf32>
    tpu.vector_store %arg8[%c0_42, %c0_43, %c0_44], %138 {strides = array<i32>} : memref<1x64x128xf32, #tpu.memory_space<vmem>>, vector<1x64x128xf32>,
    return
  }
  func.func @transform_0(%arg0: i32, %arg1: i32) -> (i32, i32, i32) {
    %c0_i32 = arith.constant 0 : i32
    %c0_i32_0 = arith.constant 0 : i32
    return %arg0, %arg1, %c0_i32 : i32, i32, i32
  }
  func.func @transform_1(%arg0: i32, %arg1: i32) -> (i32, i32, i32) {
    %c8_i32 = arith.constant 8 : i32
    %0 = arith.muli %arg1, %c8_i32 : i32
    %c1_i32 = arith.constant 1 : i32
    %1 = arith.subi %0, %c1_i32 : i32
    %c0_i32 = arith.constant 0 : i32
    %2 = arith.maxsi %1, %c0_i32 : i32
    %c0_i32_0 = arith.constant 0 : i32
    %c0_i32_1 = arith.constant 0 : i32
    return %arg0, %2, %c0_i32_0 : i32, i32, i32
  }
  func.func @transform_2(%arg0: i32, %arg1: i32) -> (i32, i32, i32) {
    %c1_i32 = arith.constant 1 : i32
    %0 = arith.addi %arg1, %c1_i32 : i32
    %c8_i32 = arith.constant 8 : i32
    %1 = arith.muli %0, %c8_i32 : i32
    %c15_i32 = arith.constant 15 : i32
    %2 = arith.minsi %1, %c15_i32 : i32
    %c0_i32 = arith.constant 0 : i32
    %c0_i32_0 = arith.constant 0 : i32
    return %arg0, %2, %c0_i32 : i32, i32, i32
  }
  func.func @transform_3(%arg0: i32, %arg1: i32) -> (i32, i32) {
    %c0_i32 = arith.constant 0 : i32
    %c0_i32_0 = arith.constant 0 : i32
    %c0_i32_1 = arith.constant 0 : i32
    return %c0_i32, %c0_i32_0 : i32, i32
  }
  func.func @transform_4(%arg0: i32, %arg1: i32) -> (i32, i32) {
    %c0_i32 = arith.constant 0 : i32
    %c0_i32_0 = arith.constant 0 : i32
    %c0_i32_1 = arith.constant 0 : i32
    return %c0_i32, %c0_i32_0 : i32, i32
  }
  func.func @transform_5(%arg0: i32, %arg1: i32) -> (i32, i32) {
    %c0_i32 = arith.constant 0 : i32
    %c0_i32_0 = arith.constant 0 : i32
    %c0_i32_1 = arith.constant 0 : i32
    return %c0_i32, %c0_i32_0 : i32, i32
  }
  func.func @transform_6(%arg0: i32, %arg1: i32) -> (i32, i32, i32) {
    %c0_i32 = arith.constant 0 : i32
    %c0_i32_0 = arith.constant 0 : i32
    return %arg0, %arg1, %c0_i32 : i32, i32, i32
  }
}

</mosaic_0001>

<llo_original>
// kernel: conv_module_forward.1
$region0: #{conv_module_forward.1}
  #allocation0 [shape = 'u32[]', space=smem, size = 0x4, offset = 0x4, fixed_abs, tag = 'smem constant byte address 0x4 - core index']
  #allocation1 [shape = 'u32[72,128]{1,0:T(1,128)}', space=vmem, size = 0x9000, scoped, tag = 'internal scratch']
  %s0 = inlined_call_operand.vmem [shape: f32[2,128,128], index: 0, kind: input, shape index: {}, may-alias: {0,1,2}]
  %s1 = inlined_call_operand.vmem [shape: f32[2,128,128], index: 1, kind: input, shape index: {}, may-alias: {0,1,2}]
  %s2 = inlined_call_operand.vmem [shape: f32[2,128,128], index: 2, kind: input, shape index: {}, may-alias: {0,1,2}]
  %s3 = inlined_call_operand.vmem [shape: f32[9,128], index: 3, kind: input, shape index: {}]
  %s4 = inlined_call_operand.vmem [shape: bf16[128,256], index: 4, kind: input, shape index: {}]
  %s5 = inlined_call_operand.vmem [shape: bf16[128,128], index: 5, kind: input, shape index: {}]
  %s6 = inlined_call_operand.hbm [shape: f32[2,128,128], index: 6, kind: output, shape index: {}]
  %s7 = sld [smem:[#allocation0]]
  $region57: #{conv_module_forward.1} parent=0
    _
  %s9 = ssub.s32 1, %s7
  %s10 = scalar_select 0, %s9, %s7
  $region1: #{conv_module_forward.1} parent=0
    #allocation2 [shape = 'u8[65536]{0}', space=vmem, size = 0x10000, scoped, tag = 'output window, operand 0']
    #allocation3 [shape = 's32[2]{0}', space=sflag, size = 0x8, scoped, tag = 'scoped memory for conv_module_forward.1']
    %11 = vsyncpa [#allocation3], 0
    %s12 = scalar_lea.sflag [#allocation3], 1
    %13 = vsyncpa %s12, 0
    loop: start=0, step=1, limit=6
    $region2: #{conv_module_forward.1} parent=1 // loop_pre_header
      _
    $region3: #{conv_module_forward.1} parent=1 // loop_header
      %s15 = sphi 0, %s19
      %p16 = scmp.ge.s32.totalorder %s15, 6
      %s22 = sphi 0, %s34
      %s23 = sphi 0, %s30
      %s24 = sphi 0, %s22
      %s25 = sphi 0, %s23
      %s26 = sphi 0, %s24
      %s27 = sphi 0, %s25
      %s39 = sphi 0, %s41
      %s42 = sphi 0, %s39
      %s43 = sphi 0, %s42
      %s59 = sphi 0, %s43
      %s75 = sphi 0, %s77
      %s78 = sphi 0, %s75
      %s79 = sphi 0, %s78
      %s95 = sphi 0, %s79
      %s111 = sphi 0, %s113
      %s114 = sphi 0, %s111
      %s115 = sphi 0, %s114
      %s131 = sphi 0, %s115
      %s135 = sphi 0, %s135
      %s137 = sphi 0, %s135
      %s138 = sphi 0, %s137
      %s152 = sphi 0, %s138
      %s156 = sphi 0, %s156
      %s158 = sphi 0, %s156
      %s159 = sphi 0, %s158
      %s173 = sphi 0, %s159
      %s177 = sphi 0, %s177
      %s179 = sphi 0, %s177
      %s180 = sphi 0, %s179
      %s194 = sphi 0, %s180
      %s202 = sphi 0, %s204
      %s205 = sphi 0, %s202
      %s206 = sphi 0, %s205
      %s222 = sphi 0, %s206
    $region4: #{conv_module_forward.1} parent=1 // loop_header_branch
      %18 = sbr.rel (%p16) target = $region8
    $region5: #{conv_module_forward.1} parent=1 // loop_body
      %s20 = ssub.s32 %s15, 1
      %s21 = ssub.s32 %s15, 2
      %s28 = sadd.s32 1, %s23
      %p29 = scmp.ge.s32.totalorder %s28, 2
      %s30 = scalar_select %p29, 0, %s28
      %s31 = sadd.s32 1, %s22
      %s32 = scalar_select %p29, %s31, %s22
      %p33 = scmp.ge.s32.totalorder %s32, 2
      %s34 = scalar_select %p33, 0, %s32
      %s35 = ssub.s32 %s22, %s34
      %s36 = ssub.s32 %s23, %s30
      %s37 = sor.u32 %s35, %s36
      %p38 = scmp.eq.s32.totalorder %s37, 0
      %s40 = sadd.s32 %s39, 1
      %s41 = scalar_select %p38, %s39, %s40
      %p44 = pneg %p38
      %p45 = scmp.eq.s32.totalorder %s15, 3
      %p46 = por %p44, %p45
      %p47 = scmp.ne.s32.totalorder %s39, %s42
      %p48 = scmp.eq.s32.totalorder %s15, 0
      %p49 = por %p47, %p48
      %p50 = scmp.ne.s32.totalorder %s39, %s42
      %p51 = scmp.eq.s32.totalorder %s20, 3
      %p52 = por %p50, %p51
      %p53 = scmp.ne.s32.totalorder %s42, %s43
      %p54 = scmp.eq.s32.totalorder %s20, 0
      %p55 = por %p53, %p54
      %p56 = scmp.ne.s32.totalorder %s42, %s43
      %p57 = scmp.eq.s32.totalorder %s21, 3
      %p58 = por %p56, %p57
      %p60 = scmp.ne.s32.totalorder %s43, %s59
      %p61 = scmp.eq.s32.totalorder %s21, 0
      %p62 = por %p60, %p61
      %s63 = smul.u32 %s23, 8
      %s64 = ssub.s32 %s63, 1
      %p65 = scmp.gt.s32.totalorder %s64, 0
      %s66 = scalar_select %p65, %s64, 0
      %s67 = smul.u32 %s30, 8
      %s68 = ssub.s32 %s67, 1
      %p69 = scmp.gt.s32.totalorder %s68, 0
      %s70 = scalar_select %p69, %s68, 0
      %s71 = ssub.s32 %s22, %s34
      %s72 = ssub.s32 %s66, %s70
      %s73 = sor.u32 %s71, %s72
      %p74 = scmp.eq.s32.totalorder %s73, 0
      %s76 = sadd.s32 %s75, 1
      %s77 = scalar_select %p74, %s75, %s76
      %p80 = pneg %p74
      %p81 = scmp.eq.s32.totalorder %s15, 3
      %p82 = por %p80, %p81
      %p83 = scmp.ne.s32.totalorder %s75, %s78
      %p84 = scmp.eq.s32.totalorder %s15, 0
      %p85 = por %p83, %p84
      %p86 = scmp.ne.s32.totalorder %s75, %s78
      %p87 = scmp.eq.s32.totalorder %s20, 3
      %p88 = por %p86, %p87
      %p89 = scmp.ne.s32.totalorder %s78, %s79
      %p90 = scmp.eq.s32.totalorder %s20, 0
      %p91 = por %p89, %p90
      %p92 = scmp.ne.s32.totalorder %s78, %s79
      %p93 = scmp.eq.s32.totalorder %s21, 3
      %p94 = por %p92, %p93
      %p96 = scmp.ne.s32.totalorder %s79, %s95
      %p97 = scmp.eq.s32.totalorder %s21, 0
      %p98 = por %p96, %p97
      %s99 = sadd.s32 %s23, 1
      %s100 = smul.u32 %s99, 8
      %p101 = scmp.lt.s32.totalorder %s100, 15
      %s102 = scalar_select %p101, %s100, 15
      %s103 = sadd.s32 %s30, 1
      %s104 = smul.u32 %s103, 8
      %p105 = scmp.lt.s32.totalorder %s104, 15
      %s106 = scalar_select %p105, %s104, 15
      %s107 = ssub.s32 %s22, %s34
      %s108 = ssub.s32 %s102, %s106
      %s109 = sor.u32 %s107, %s108
      %p110 = scmp.eq.s32.totalorder %s109, 0
      %s112 = sadd.s32 %s111, 1
      %s113 = scalar_select %p110, %s111, %s112
      %p116 = pneg %p110
      %p117 = scmp.eq.s32.totalorder %s15, 3
      %p118 = por %p116, %p117
      %p119 = scmp.ne.s32.totalorder %s111, %s114
      %p120 = scmp.eq.s32.totalorder %s15, 0
      %p121 = por %p119, %p120
      %p122 = scmp.ne.s32.totalorder %s111, %s114
      %p123 = scmp.eq.s32.totalorder %s20, 3
      %p124 = por %p122, %p123
      %p125 = scmp.ne.s32.totalorder %s114, %s115
      %p126 = scmp.eq.s32.totalorder %s20, 0
      %p127 = por %p125, %p126
      %p128 = scmp.ne.s32.totalorder %s114, %s115
      %p129 = scmp.eq.s32.totalorder %s21, 3
      %p130 = por %p128, %p129
      %p132 = scmp.ne.s32.totalorder %s115, %s131
      %p133 = scmp.eq.s32.totalorder %s21, 0
      %p134 = por %p132, %p133
      %s136 = sadd.s32 %s135, 1
      %p139 = scmp.eq.s32.totalorder %s15, 3
      %p140 = scmp.ne.s32.totalorder %s135, %s137
      %p141 = scmp.eq.s32.totalorder %s15, 0
      %p142 = por %p140, %p141
      %p143 = scmp.ne.s32.totalorder %s135, %s137
      %p144 = scmp.eq.s32.totalorder %s20, 3
      %p145 = por %p143, %p144
      %p146 = scmp.ne.s32.totalorder %s137, %s138
      %p147 = scmp.eq.s32.totalorder %s20, 0
      %p148 = por %p146, %p147
      %p149 = scmp.ne.s32.totalorder %s137, %s138
      %p150 = scmp.eq.s32.totalorder %s21, 3
      %p151 = por %p149, %p150
      %p153 = scmp.ne.s32.totalorder %s138, %s152
      %p154 = scmp.eq.s32.totalorder %s21, 0
      %p155 = por %p153, %p154
      %s157 = sadd.s32 %s156, 1
      %p160 = scmp.eq.s32.totalorder %s15, 3
      %p161 = scmp.ne.s32.totalorder %s156, %s158
      %p162 = scmp.eq.s32.totalorder %s15, 0
      %p163 = por %p161, %p162
      %p164 = scmp.ne.s32.totalorder %s156, %s158
      %p165 = scmp.eq.s32.totalorder %s20, 3
      %p166 = por %p164, %p165
      %p167 = scmp.ne.s32.totalorder %s158, %s159
      %p168 = scmp.eq.s32.totalorder %s20, 0
      %p169 = por %p167, %p168
      %p170 = scmp.ne.s32.totalorder %s158, %s159
      %p171 = scmp.eq.s32.totalorder %s21, 3
      %p172 = por %p170, %p171
      %p174 = scmp.ne.s32.totalorder %s159, %s173
      %p175 = scmp.eq.s32.totalorder %s21, 0
      %p176 = por %p174, %p175
      %s178 = sadd.s32 %s177, 1
      %p181 = scmp.eq.s32.totalorder %s15, 3
      %p182 = scmp.ne.s32.totalorder %s177, %s179
      %p183 = scmp.eq.s32.totalorder %s15, 0
      %p184 = por %p182, %p183
      %p185 = scmp.ne.s32.totalorder %s177, %s179
      %p186 = scmp.eq.s32.totalorder %s20, 3
      %p187 = por %p185, %p186
      %p188 = scmp.ne.s32.totalorder %s179, %s180
      %p189 = scmp.eq.s32.totalorder %s20, 0
      %p190 = por %p188, %p189
      %p191 = scmp.ne.s32.totalorder %s179, %s180
      %p192 = scmp.eq.s32.totalorder %s21, 3
      %p193 = por %p191, %p192
      %p195 = scmp.ne.s32.totalorder %s180, %s194
      %p196 = scmp.eq.s32.totalorder %s21, 0
      %p197 = por %p195, %p196
      %s198 = ssub.s32 %s22, %s34
      %s199 = ssub.s32 %s23, %s30
      %s200 = sor.u32 %s198, %s199
      %p201 = scmp.eq.s32.totalorder %s200, 0
      %s203 = sadd.s32 %s202, 1
      %s204 = scalar_select %p201, %s202, %s203
      %p207 = pneg %p201
      %p208 = scmp.eq.s32.totalorder %s15, 3
      %p209 = por %p207, %p208
      %p210 = scmp.ne.s32.totalorder %s202, %s205
      %p211 = scmp.eq.s32.totalorder %s15, 0
      %p212 = por %p210, %p211
      %p213 = scmp.ne.s32.totalorder %s202, %s205
      %p214 = scmp.eq.s32.totalorder %s20, 3
      %p215 = por %p213, %p214
      %p216 = scmp.ne.s32.totalorder %s205, %s206
      %p217 = scmp.eq.s32.totalorder %s20, 0
      %p218 = por %p216, %p217
      %p219 = scmp.ne.s32.totalorder %s205, %s206
      %p220 = scmp.eq.s32.totalorder %s21, 3
      %p221 = por %p219, %p220
      %p223 = scmp.ne.s32.totalorder %s206, %s222
      %p224 = scmp.eq.s32.totalorder %s21, 0
      %p225 = por %p223, %p224
      %p226 = scmp.le.s32.totalorder 1, %s15
      %p227 = scmp.lt.s32.totalorder %s15, 5
      %p228 = pnand %p226, %p227
      %p229 = pneg %p228
      // Predicated region
      $region9: #{conv_module_forward.1} parent=5 // pred_check
        _
      $region10: #{conv_module_forward.1} parent=5 // pred_check_branch
        %231 = sbr.rel (%p228) target = $region12
      $region11: #{conv_module_forward.1} parent=5 // pred_region
        %s232 = ssub.s32 %s15, 1
        // Predicated region
        $region13: #{conv_module_forward.1} parent=11 // pred_check
          %p233 = pneg %p148
        $region14: #{conv_module_forward.1} parent=11 // pred_check_branch
          %235 = sbr.rel (%p233) target = $region16
        $region15: #{conv_module_forward.1} parent=11 // pred_region
          _
        $region16: #{conv_module_forward.1} parent=11 // pred_fallthru
          _
        // Predicated region
        $region17: #{conv_module_forward.1} parent=11 // pred_check
          %p236 = pneg %p169
        $region18: #{conv_module_forward.1} parent=11 // pred_check_branch
          %238 = sbr.rel (%p236) target = $region20
        $region19: #{conv_module_forward.1} parent=11 // pred_region
          _
        $region20: #{conv_module_forward.1} parent=11 // pred_fallthru
          _
        // Predicated region
        $region21: #{conv_module_forward.1} parent=11 // pred_check
          %p239 = pneg %p190
        $region22: #{conv_module_forward.1} parent=11 // pred_check_branch
          %241 = sbr.rel (%p239) target = $region24
        $region23: #{conv_module_forward.1} parent=11 // pred_region
          _
        $region24: #{conv_module_forward.1} parent=11 // pred_fallthru
          _
      $region12: #{conv_module_forward.1} parent=5 // pred_fallthru
        _
      %p242 = scmp.lt.s32.totalorder %s15, 4
      // Predicated region
      $region25: #{conv_module_forward.1} parent=5 // pred_check
        %p243 = pneg %p242
      $region26: #{conv_module_forward.1} parent=5 // pred_check_branch
        %245 = sbr.rel (%p243) target = $region28
      $region27: #{conv_module_forward.1} parent=5 // pred_region
        // Predicated region
        $region29: #{conv_module_forward.1} parent=27 // pred_check
          %p246 = pneg %p49
        $region30: #{conv_module_forward.1} parent=27 // pred_check_branch
          %248 = sbr.rel (%p246) target = $region32
        $region31: #{conv_module_forward.1} parent=27 // pred_region
          %s249 = smul.u32 8, %s23
          %p250 = scmp.lt.s32.totalorder %s22, 1
          %s251 = scalar_select %p250, %s22, 1
          %p252 = scmp.lt.s32.totalorder %s249, 15
          %s253 = scalar_select %p252, %s249, 15
          %s254 = smul.addr %s251, 16
          %s255 = sadd.s32 %s253, %s254
          %s256 = smul.addr %s255, 8
          %s257 = scalar_lea.vmem %s0, %s256
          %s258 = smul.u32 8, %s23
        $region32: #{conv_module_forward.1} parent=27 // pred_fallthru
          _
        // Predicated region
        $region33: #{conv_module_forward.1} parent=27 // pred_check
          %p259 = pneg %p85
        $region34: #{conv_module_forward.1} parent=27 // pred_check_branch
          %261 = sbr.rel (%p259) target = $region36
        $region35: #{conv_module_forward.1} parent=27 // pred_region
          %s262 = smul.u32 %s23, 8
          %s263 = ssub.s32 %s262, 1
          %p264 = scmp.gt.s32.totalorder %s263, 0
          %s265 = scalar_select %p264, %s263, 0
          %p266 = scmp.lt.s32.totalorder %s22, 1
          %s267 = scalar_select %p266, %s22, 1
          %p268 = scmp.lt.s32.totalorder %s265, 15
          %s269 = scalar_select %p268, %s265, 15
          %s270 = smul.addr %s267, 16
          %s271 = sadd.s32 %s269, %s270
          %s272 = smul.addr %s271, 8
          %s273 = scalar_lea.vmem %s1, %s272
          %s274 = smul.u32 %s23, 8
          %s275 = ssub.s32 %s274, 1
          %p276 = scmp.gt.s32.totalorder %s275, 0
          %s277 = scalar_select %p276, %s275, 0
        $region36: #{conv_module_forward.1} parent=27 // pred_fallthru
          _
        // Predicated region
        $region37: #{conv_module_forward.1} parent=27 // pred_check
          %p278 = pneg %p121
        $region38: #{conv_module_forward.1} parent=27 // pred_check_branch
          %280 = sbr.rel (%p278) target = $region40
        $region39: #{conv_module_forward.1} parent=27 // pred_region
          %s281 = sadd.s32 %s23, 1
          %s282 = smul.u32 %s281, 8
          %p283 = scmp.lt.s32.totalorder %s282, 15
          %s284 = scalar_select %p283, %s282, 15
          %p285 = scmp.lt.s32.totalorder %s22, 1
          %s286 = scalar_select %p285, %s22, 1
          %p287 = scmp.lt.s32.totalorder %s284, 15
          %s288 = scalar_select %p287, %s284, 15
          %s289 = smul.addr %s286, 16
          %s290 = sadd.s32 %s288, %s289
          %s291 = smul.addr %s290, 8
          %s292 = scalar_lea.vmem %s2, %s291
          %s293 = sadd.s32 %s23, 1
          %s294 = smul.u32 %s293, 8
          %p295 = scmp.lt.s32.totalorder %s294, 15
          %s296 = scalar_select %p295, %s294, 15
        $region40: #{conv_module_forward.1} parent=27 // pred_fallthru
          _
      $region28: #{conv_module_forward.1} parent=5 // pred_fallthru
        _
      %p297 = scmp.le.s32.totalorder 1, %s15
      %p298 = scmp.lt.s32.totalorder %s15, 5
      %p299 = pnand %p297, %p298
      %p300 = pneg %p299
      // Predicated region
      $region41: #{conv_module_forward.1} parent=5 // pred_check
        _
      $region42: #{conv_module_forward.1} parent=5 // pred_check_branch
        %302 = sbr.rel (%p299) target = $region44
      $region43: #{conv_module_forward.1} parent=5 // pred_region
        %s303 = ssub.s32 %s15, 1
        %s304 = smul.u32 8, %s25
        %p305 = scmp.lt.s32.totalorder %s24, 1
        %s306 = scalar_select %p305, %s24, 1
        %p307 = scmp.lt.s32.totalorder %s304, 15
        %s308 = scalar_select %p307, %s304, 15
        %s309 = smul.addr %s306, 16
        %s310 = sadd.s32 %s308, %s309
        %s311 = smul.addr %s310, 8
        %s312 = scalar_lea.vmem %s0, %s311
        %p313 = pneg %p55
        %p314 = pneg %p52
        %s315 = smul.u32 %s25, 8
        %s316 = ssub.s32 %s315, 1
        %p317 = scmp.gt.s32.totalorder %s316, 0
        %s318 = scalar_select %p317, %s316, 0
        %p319 = scmp.lt.s32.totalorder %s24, 1
        %s320 = scalar_select %p319, %s24, 1
        %p321 = scmp.lt.s32.totalorder %s318, 15
        %s322 = scalar_select %p321, %s318, 15
        %s323 = smul.addr %s320, 16
        %s324 = sadd.s32 %s322, %s323
        %s325 = smul.addr %s324, 8
        %s326 = scalar_lea.vmem %s1, %s325
        %p327 = pneg %p91
        %p328 = pneg %p88
        %s329 = sadd.s32 %s25, 1
        %s330 = smul.u32 %s329, 8
        %p331 = scmp.lt.s32.totalorder %s330, 15
        %s332 = scalar_select %p331, %s330, 15
        %p333 = scmp.lt.s32.totalorder %s24, 1
        %s334 = scalar_select %p333, %s24, 1
        %p335 = scmp.lt.s32.totalorder %s332, 15
        %s336 = scalar_select %p335, %s332, 15
        %s337 = smul.addr %s334, 16
        %s338 = sadd.s32 %s336, %s337
        %s339 = smul.addr %s338, 8
        %s340 = scalar_lea.vmem %s2, %s339
        %p341 = pneg %p127
        %p342 = pneg %p124
        %p343 = pneg %p148
        %p344 = pneg %p145
        %p345 = pneg %p169
        %p346 = pneg %p166
        %p347 = pneg %p190
        %p348 = pneg %p187
        %p349 = pneg %p218
        %p350 = pneg %p215
        %s351 = sand.u32 %s205, 1
        %s352 = scalar_lea.sflag [#allocation3], %s351
        %s353 = sand.u32 %s205, 1
        %s354 = smul.addr %s353, 64
        %s355 = scalar_lea.vmem [#allocation2], %s354
        %s356 = smul.u32 8, %s25
        %p357 = scmp.lt.s32.totalorder %s24, 1
        %s358 = scalar_select %p357, %s24, 1
        %p359 = scmp.lt.s32.totalorder %s356, 15
        %s360 = scalar_select %p359, %s356, 15
        %s361 = smul.addr %s358, 16
        %s362 = sadd.s32 %s360, %s361
        %s363 = smul.addr %s362, 8
        %s364 = scalar_lea.vmem %s0, %s363
        %s365 = smul.u32 8, %s25
        %s366 = smul.u32 %s25, 8
        %s367 = ssub.s32 %s366, 1
        %p368 = scmp.gt.s32.totalorder %s367, 0
        %s369 = scalar_select %p368, %s367, 0
        %p370 = scmp.lt.s32.totalorder %s24, 1
        %s371 = scalar_select %p370, %s24, 1
        %p372 = scmp.lt.s32.totalorder %s369, 15
        %s373 = scalar_select %p372, %s369, 15
        %s374 = smul.addr %s371, 16
        %s375 = sadd.s32 %s373, %s374
        %s376 = smul.addr %s375, 8
        %s377 = scalar_lea.vmem %s1, %s376
        %s378 = smul.u32 %s25, 8
        %s379 = ssub.s32 %s378, 1
        %p380 = scmp.gt.s32.totalorder %s379, 0
        %s381 = scalar_select %p380, %s379, 0
        %s382 = sadd.s32 %s25, 1
        %s383 = smul.u32 %s382, 8
        %p384 = scmp.lt.s32.totalorder %s383, 15
        %s385 = scalar_select %p384, %s383, 15
        %p386 = scmp.lt.s32.totalorder %s24, 1
        %s387 = scalar_select %p386, %s24, 1
        %p388 = scmp.lt.s32.totalorder %s385, 15
        %s389 = scalar_select %p388, %s385, 15
        %s390 = smul.addr %s387, 16
        %s391 = sadd.s32 %s389, %s390
        %s392 = smul.addr %s391, 8
        %s393 = scalar_lea.vmem %s2, %s392
        %s394 = sadd.s32 %s25, 1
        %s395 = smul.u32 %s394, 8
        %p396 = scmp.lt.s32.totalorder %s395, 15
        %s397 = scalar_select %p396, %s395, 15
        %s398 = smul.u32 8, %s25
        %v399 = vld [vmem:[%s3] sm:$0x1]
        %v400 = vld [vmem:[%s3 + $0x1] sm:$0x1]
        %v401 = vld [vmem:[%s3 + $0x2] sm:$0x1]
        %v402 = vld [vmem:[%s3 + $0x3] sm:$0x1]
        %v403 = vld [vmem:[%s3 + $0x4] sm:$0x1]
        %v404 = vld [vmem:[%s3 + $0x5] sm:$0x1]
        %v405 = vld [vmem:[%s3 + $0x6] sm:$0x1]
        %v406 = vld [vmem:[%s3 + $0x7] sm:$0x1]
        %v407 = vld [vmem:[%s3 + $0x8] sm:$0x1]
        %v408 = vld [vmem:[%s364] sm:$0xff]
        %v409 = vld [vmem:[%s364 + $0x8] sm:$0xff]
        %v410 = vld [vmem:[%s364 + $0x10] sm:$0xff]
        %v411 = vld [vmem:[%s364 + $0x18] sm:$0xff]
        %v412 = vld [vmem:[%s364 + $0x20] sm:$0xff]
        %v413 = vld [vmem:[%s364 + $0x28] sm:$0xff]
        %v414 = vld [vmem:[%s364 + $0x30] sm:$0xff]
        %v415 = vld [vmem:[%s364 + $0x38] sm:$0xff]
        %416 = vadd.xlane.f32.xlu0 %v408
        %v417 = vpop.xlane.xlu0 %416
        %418 = vadd.xlane.f32.xlu0 %v409
        %v419 = vpop.xlane.xlu0 %418
        %420 = vadd.xlane.f32.xlu0 %v410
        %v421 = vpop.xlane.xlu0 %420
        %422 = vadd.xlane.f32.xlu0 %v411
        %v423 = vpop.xlane.xlu0 %422
        %424 = vadd.xlane.f32.xlu0 %v412
        %v425 = vpop.xlane.xlu0 %424
        %426 = vadd.xlane.f32.xlu0 %v413
        %v427 = vpop.xlane.xlu0 %426
        %428 = vadd.xlane.f32.xlu0 %v414
        %v429 = vpop.xlane.xlu0 %428
        %430 = vadd.xlane.f32.xlu0 %v415
        %v431 = vpop.xlane.xlu0 %430
        %v432 = vrcp.pop 128.0
        %v433 = vmul.f32 128.0, %v432
        %v434 = vsub.f32 1.0, %v433
        %v435 = vmul.f32 %v432, %v434
        %v436 = vadd.f32 %v432, %v435
        %vm437 = vweird.f32 %v432
        %v438 = vsel %vm437, %v432, %v436
        %v439 = vmul.f32 %v417, %v438
        %v440 = vmul.f32 %v419, %v438
        %v441 = vmul.f32 %v421, %v438
        %v442 = vmul.f32 %v423, %v438
        %v443 = vmul.f32 %v425, %v438
        %v444 = vmul.f32 %v427, %v438
        %v445 = vmul.f32 %v429, %v438
        %v446 = vmul.f32 %v431, %v438
        %v447 = vsub.f32 %v408, %v439
        %v448 = vsub.f32 %v409, %v440
        %v449 = vsub.f32 %v410, %v441
        %v450 = vsub.f32 %v411, %v442
        %v451 = vsub.f32 %v412, %v443
        %v452 = vsub.f32 %v413, %v444
        %v453 = vsub.f32 %v414, %v445
        %v454 = vsub.f32 %v415, %v446
        %v455 = vmul.f32 %v447, %v447
        %v456 = vmul.f32 %v448, %v448
        %v457 = vmul.f32 %v449, %v449
        %v458 = vmul.f32 %v450, %v450
        %v459 = vmul.f32 %v451, %v451
        %v460 = vmul.f32 %v452, %v452
        %v461 = vmul.f32 %v453, %v453
        %v462 = vmul.f32 %v454, %v454
        %463 = vadd.xlane.f32.xlu0 %v455
        %v464 = vpop.xlane.xlu0 %463
        %465 = vadd.xlane.f32.xlu0 %v456
        %v466 = vpop.xlane.xlu0 %465
        %467 = vadd.xlane.f32.xlu0 %v457
        %v468 = vpop.xlane.xlu0 %467
        %469 = vadd.xlane.f32.xlu0 %v458
        %v470 = vpop.xlane.xlu0 %469
        %471 = vadd.xlane.f32.xlu0 %v459
        %v472 = vpop.xlane.xlu0 %471
        %473 = vadd.xlane.f32.xlu0 %v460
        %v474 = vpop.xlane.xlu0 %473
        %475 = vadd.xlane.f32.xlu0 %v461
        %v476 = vpop.xlane.xlu0 %475
        %477 = vadd.xlane.f32.xlu0 %v462
        %v478 = vpop.xlane.xlu0 %477
        %v479 = vmul.f32 %v464, %v438
        %v480 = vmul.f32 %v466, %v438
        %v481 = vmul.f32 %v468, %v438
        %v482 = vmul.f32 %v470, %v438
        %v483 = vmul.f32 %v472, %v438
        %v484 = vmul.f32 %v474, %v438
        %v485 = vmul.f32 %v476, %v438
        %v486 = vmul.f32 %v478, %v438
        %v487 = vadd.f32 %v479, 1e-05
        %v488 = vadd.f32 %v480, 1e-05
        %v489 = vadd.f32 %v481, 1e-05
        %v490 = vadd.f32 %v482, 1e-05
        %v491 = vadd.f32 %v483, 1e-05
        %v492 = vadd.f32 %v484, 1e-05
        %v493 = vadd.f32 %v485, 1e-05
        %v494 = vadd.f32 %v486, 1e-05
        %v495 = vrsqrt.pop %v487
        %v496 = vmul.f32 %v495, %v487
        %v497 = vmul.f32 %v496, %v495
        %v498 = vmul.f32 0.5, %v497
        %v499 = vsub.f32 1.5, %v498
        %v500 = vmul.f32 %v495, %v499
        %vm501 = vweird.f32 %v487
        %vm502 = vweird.f32 %v495
        %vm503 = vmor %vm501, %vm502
        %v504 = vsel %vm503, %v495, %v500
        %v505 = vrsqrt.pop %v488
        %v506 = vmul.f32 %v505, %v488
        %v507 = vmul.f32 %v506, %v505
        %v508 = vmul.f32 0.5, %v507
        %v509 = vsub.f32 1.5, %v508
        %v510 = vmul.f32 %v505, %v509
        %vm511 = vweird.f32 %v488
        %vm512 = vweird.f32 %v505
        %vm513 = vmor %vm511, %vm512
        %v514 = vsel %vm513, %v505, %v510
        %v515 = vrsqrt.pop %v489
        %v516 = vmul.f32 %v515, %v489
        %v517 = vmul.f32 %v516, %v515
        %v518 = vmul.f32 0.5, %v517
        %v519 = vsub.f32 1.5, %v518
        %v520 = vmul.f32 %v515, %v519
        %vm521 = vweird.f32 %v489
        %vm522 = vweird.f32 %v515
        %vm523 = vmor %vm521, %vm522
        %v524 = vsel %vm523, %v515, %v520
        %v525 = vrsqrt.pop %v490
        %v526 = vmul.f32 %v525, %v490
        %v527 = vmul.f32 %v526, %v525
        %v528 = vmul.f32 0.5, %v527
        %v529 = vsub.f32 1.5, %v528
        %v530 = vmul.f32 %v525, %v529
        %vm531 = vweird.f32 %v490
        %vm532 = vweird.f32 %v525
        %vm533 = vmor %vm531, %vm532
        %v534 = vsel %vm533, %v525, %v530
        %v535 = vrsqrt.pop %v491
        %v536 = vmul.f32 %v535, %v491
        %v537 = vmul.f32 %v536, %v535
        %v538 = vmul.f32 0.5, %v537
        %v539 = vsub.f32 1.5, %v538
        %v540 = vmul.f32 %v535, %v539
        %vm541 = vweird.f32 %v491
        %vm542 = vweird.f32 %v535
        %vm543 = vmor %vm541, %vm542
        %v544 = vsel %vm543, %v535, %v540
        %v545 = vrsqrt.pop %v492
        %v546 = vmul.f32 %v545, %v492
        %v547 = vmul.f32 %v546, %v545
        %v548 = vmul.f32 0.5, %v547
        %v549 = vsub.f32 1.5, %v548
        %v550 = vmul.f32 %v545, %v549
        %vm551 = vweird.f32 %v492
        %vm552 = vweird.f32 %v545
        %vm553 = vmor %vm551, %vm552
        %v554 = vsel %vm553, %v545, %v550
        %v555 = vrsqrt.pop %v493
        %v556 = vmul.f32 %v555, %v493
        %v557 = vmul.f32 %v556, %v555
        %v558 = vmul.f32 0.5, %v557
        %v559 = vsub.f32 1.5, %v558
        %v560 = vmul.f32 %v555, %v559
        %vm561 = vweird.f32 %v493
        %vm562 = vweird.f32 %v555
        %vm563 = vmor %vm561, %vm562
        %v564 = vsel %vm563, %v555, %v560
        %v565 = vrsqrt.pop %v494
        %v566 = vmul.f32 %v565, %v494
        %v567 = vmul.f32 %v566, %v565
        %v568 = vmul.f32 0.5, %v567
        %v569 = vsub.f32 1.5, %v568
        %v570 = vmul.f32 %v565, %v569
        %vm571 = vweird.f32 %v494
        %vm572 = vweird.f32 %v565
        %vm573 = vmor %vm571, %vm572
        %v574 = vsel %vm573, %v565, %v570
        %v575 = vmul.f32 %v447, %v504
        %v576 = vmul.f32 %v448, %v514
        %v577 = vmul.f32 %v449, %v524
        %v578 = vmul.f32 %v450, %v534
        %v579 = vmul.f32 %v451, %v544
        %v580 = vmul.f32 %v452, %v554
        %v581 = vmul.f32 %v453, %v564
        %v582 = vmul.f32 %v454, %v574
        %v583 = vperm.slane %v399, 0
        %v584 = vmul.f32 %v575, %v583
        %v585 = vmul.f32 %v576, %v583
        %v586 = vmul.f32 %v577, %v583
        %v587 = vmul.f32 %v578, %v583
        %v588 = vmul.f32 %v579, %v583
        %v589 = vmul.f32 %v580, %v583
        %v590 = vmul.f32 %v581, %v583
        %v591 = vmul.f32 %v582, %v583
        %v592 = vperm.slane %v400, 0
        %v593 = vadd.f32 %v584, %v592
        %v594 = vadd.f32 %v585, %v592
        %v595 = vadd.f32 %v586, %v592
        %v596 = vadd.f32 %v587, %v592
        %v597 = vadd.f32 %v588, %v592
        %v598 = vadd.f32 %v589, %v592
        %v599 = vadd.f32 %v590, %v592
        %v600 = vadd.f32 %v591, %v592
        %v601 = vpack.c.bf16 %v594, %v593
        %v602 = vpack.c.bf16 %v596, %v595
        %v603 = vpack.c.bf16 %v598, %v597
        %v604 = vpack.c.bf16 %v600, %v599
        %v605 = vld [vmem:[%s4] sm:$0xff]
        %v606 = vld [vmem:[%s4 + $0x8] sm:$0xff]
        %v607 = vld [vmem:[%s4 + $0x10] sm:$0xff]
        %v608 = vld [vmem:[%s4 + $0x18] sm:$0xff]
        %v609 = vld [vmem:[%s4 + $0x20] sm:$0xff]
        %v610 = vld [vmem:[%s4 + $0x28] sm:$0xff]
        %v611 = vld [vmem:[%s4 + $0x30] sm:$0xff]
        %v612 = vld [vmem:[%s4 + $0x38] sm:$0xff]
        %v613 = vld [vmem:[%s4 + $0x40] sm:$0xff]
        %v614 = vld [vmem:[%s4 + $0x48] sm:$0xff]
        %v615 = vld [vmem:[%s4 + $0x50] sm:$0xff]
        %v616 = vld [vmem:[%s4 + $0x58] sm:$0xff]
        %v617 = vld [vmem:[%s4 + $0x60] sm:$0xff]
        %v618 = vld [vmem:[%s4 + $0x68] sm:$0xff]
        %v619 = vld [vmem:[%s4 + $0x70] sm:$0xff]
        %v620 = vld [vmem:[%s4 + $0x78] sm:$0xff]
        %v637 = vunpack.c.l.b16 %v605
        %v638 = vunpack.c.h.b16 %v605
        %v639 = vunpack.c.l.b16 %v606
        %v640 = vunpack.c.h.b16 %v606
        %v641 = vunpack.c.l.b16 %v607
        %v642 = vunpack.c.h.b16 %v607
        %v643 = vunpack.c.l.b16 %v608
        %v644 = vunpack.c.h.b16 %v608
        %v645 = vunpack.c.l.b16 %v609
        %v646 = vunpack.c.h.b16 %v609
        %v647 = vunpack.c.l.b16 %v610
        %v648 = vunpack.c.h.b16 %v610
        %v649 = vunpack.c.l.b16 %v611
        %v650 = vunpack.c.h.b16 %v611
        %v651 = vunpack.c.l.b16 %v612
        %v652 = vunpack.c.h.b16 %v612
        %v653 = vunpack.c.l.b16 %v613
        %v654 = vunpack.c.h.b16 %v613
        %v655 = vunpack.c.l.b16 %v614
        %v656 = vunpack.c.h.b16 %v614
        %v657 = vunpack.c.l.b16 %v615
        %v658 = vunpack.c.h.b16 %v615
        %v659 = vunpack.c.l.b16 %v616
        %v660 = vunpack.c.h.b16 %v616
        %v661 = vunpack.c.l.b16 %v617
        %v662 = vunpack.c.h.b16 %v617
        %v663 = vunpack.c.l.b16 %v618
        %v664 = vunpack.c.h.b16 %v618
        %v665 = vunpack.c.l.b16 %v619
        %v666 = vunpack.c.h.b16 %v619
        %v667 = vunpack.c.l.b16 %v620
        %v668 = vunpack.c.h.b16 %v620
        %v669 = vpack.c.b16 %v639, %v637
        %v670 = vpack.c.b16 %v640, %v638
        %v671 = vpack.c.b16 %v643, %v641
        %v672 = vpack.c.b16 %v644, %v642
        %v673 = vpack.c.b16 %v647, %v645
        %v674 = vpack.c.b16 %v648, %v646
        %v675 = vpack.c.b16 %v651, %v649
        %v676 = vpack.c.b16 %v652, %v650
        %v677 = vpack.c.b16 %v655, %v653
        %v678 = vpack.c.b16 %v656, %v654
        %v679 = vpack.c.b16 %v659, %v657
        %v680 = vpack.c.b16 %v660, %v658
        %v681 = vpack.c.b16 %v663, %v661
        %v682 = vpack.c.b16 %v664, %v662
        %v683 = vpack.c.b16 %v667, %v665
        %v684 = vpack.c.b16 %v668, %v666
        %701 = vmatpush.bf16.msra.mxu0 %v683
        %702 = vmatpush.bf16.msra.mxu0 %v681
        %703 = vmatpush.bf16.msra.mxu0 %v679
        %704 = vmatpush.bf16.msra.mxu0 %v677
        %705 = vmatpush.bf16.msra.mxu0 %v675
        %706 = vmatpush.bf16.msra.mxu0 %v673
        %707 = vmatpush.bf16.msra.mxu0 %v671
        %708 = vmatpush.bf16.msra.mxu0 %v669
        %709 = vmatmul.bf16.gmra.mxu0 %v601
        %v710 = vpop.f32.mrf.mxu0
        %v711 = vadd.f32 0.0, %v710
        %v712 = vpop.f32.mrf.mxu0
        %v713 = vadd.f32 0.0, %v712
        %714 = vmatmul.bf16.gmra.mxu0 %v602
        %v715 = vpop.f32.mrf.mxu0
        %v716 = vadd.f32 0.0, %v715
        %v717 = vpop.f32.mrf.mxu0
        %v718 = vadd.f32 0.0, %v717
        %719 = vmatmul.bf16.gmra.mxu0 %v603
        %v720 = vpop.f32.mrf.mxu0
        %v721 = vadd.f32 0.0, %v720
        %v722 = vpop.f32.mrf.mxu0
        %v723 = vadd.f32 0.0, %v722
        %724 = vmatmul.bf16.gmra.mxu0 %v604
        %v725 = vpop.f32.mrf.mxu0
        %v726 = vadd.f32 0.0, %v725
        %v727 = vpop.f32.mrf.mxu0
        %v728 = vadd.f32 0.0, %v727
        %729 = vdwg.mxu0
        %730 = vmatpush.bf16.msra.mxu0 %v684
        %731 = vmatpush.bf16.msra.mxu0 %v682
        %732 = vmatpush.bf16.msra.mxu0 %v680
        %733 = vmatpush.bf16.msra.mxu0 %v678
        %734 = vmatpush.bf16.msra.mxu0 %v676
        %735 = vmatpush.bf16.msra.mxu0 %v674
        %736 = vmatpush.bf16.msra.mxu0 %v672
        %737 = vmatpush.bf16.msra.mxu0 %v670
        %738 = vmatmul.bf16.gmra.mxu0 %v601
        %v739 = vpop.f32.mrf.mxu0
        %v740 = vadd.f32 0.0, %v739
        %v741 = vpop.f32.mrf.mxu0
        %v742 = vadd.f32 0.0, %v741
        %743 = vmatmul.bf16.gmra.mxu0 %v602
        %v744 = vpop.f32.mrf.mxu0
        %v745 = vadd.f32 0.0, %v744
        %v746 = vpop.f32.mrf.mxu0
        %v747 = vadd.f32 0.0, %v746
        %748 = vmatmul.bf16.gmra.mxu0 %v603
        %v749 = vpop.f32.mrf.mxu0
        %v750 = vadd.f32 0.0, %v749
        %v751 = vpop.f32.mrf.mxu0
        %v752 = vadd.f32 0.0, %v751
        %753 = vmatmul.bf16.gmra.mxu0 %v604
        %v754 = vpop.f32.mrf.mxu0
        %v755 = vadd.f32 0.0, %v754
        %v756 = vpop.f32.mrf.mxu0
        %v757 = vadd.f32 0.0, %v756
        %758 = vdwg.mxu0
        %v759 = vperm.slane %v401, 0
        %v760 = vadd.f32 %v711, %v759
        %v761 = vadd.f32 %v713, %v759
        %v762 = vadd.f32 %v716, %v759
        %v763 = vadd.f32 %v718, %v759
        %v764 = vadd.f32 %v721, %v759
        %v765 = vadd.f32 %v723, %v759
        %v766 = vadd.f32 %v726, %v759
        %v767 = vadd.f32 %v728, %v759
        %v768 = vperm.slane %v402, 0
        %v769 = vadd.f32 %v740, %v768
        %v770 = vadd.f32 %v742, %v768
        %v771 = vadd.f32 %v745, %v768
        %v772 = vadd.f32 %v747, %v768
        %v773 = vadd.f32 %v750, %v768
        %v774 = vadd.f32 %v752, %v768
        %v775 = vadd.f32 %v755, %v768
        %v776 = vadd.f32 %v757, %v768
        %v777 = vxor.u32 %v769, 2147483648
        %v778 = vxor.u32 %v770, 2147483648
        %v779 = vxor.u32 %v771, 2147483648
        %v780 = vxor.u32 %v772, 2147483648
        %v781 = vxor.u32 %v773, 2147483648
        %v782 = vxor.u32 %v774, 2147483648
        %v783 = vxor.u32 %v775, 2147483648
        %v784 = vxor.u32 %v776, 2147483648
        %v785 = vmul.f32 %v777, 1.442695
        %v786 = vpow.pop %v785
        %v787 = vmul.f32 %v778, 1.442695
        %v788 = vpow.pop %v787
        %v789 = vmul.f32 %v779, 1.442695
        %v790 = vpow.pop %v789
        %v791 = vmul.f32 %v780, 1.442695
        %v792 = vpow.pop %v791
        %v793 = vmul.f32 %v781, 1.442695
        %v794 = vpow.pop %v793
        %v795 = vmul.f32 %v782, 1.442695
        %v796 = vpow.pop %v795
        %v797 = vmul.f32 %v783, 1.442695
        %v798 = vpow.pop %v797
        %v799 = vmul.f32 %v784, 1.442695
        %v800 = vpow.pop %v799
        %v801 = vadd.f32 %v786, 1.0
        %v802 = vadd.f32 %v788, 1.0
        %v803 = vadd.f32 %v790, 1.0
        %v804 = vadd.f32 %v792, 1.0
        %v805 = vadd.f32 %v794, 1.0
        %v806 = vadd.f32 %v796, 1.0
        %v807 = vadd.f32 %v798, 1.0
        %v808 = vadd.f32 %v800, 1.0
        %v809 = vrcp.pop %v801
        %v810 = vmul.f32 %v801, %v809
        %v811 = vsub.f32 1.0, %v810
        %v812 = vmul.f32 %v809, %v811
        %v813 = vadd.f32 %v809, %v812
        %vm814 = vweird.f32 %v801
        %vm815 = vweird.f32 %v809
        %vm816 = vmor %vm814, %vm815
        %v817 = vsel %vm816, %v809, %v813
        %v818 = vand.u32 2147483647, %v801
        %vm819 = vcmp.eq.f32.partialorder %v818, 8.507059e+37
        %v820 = vand.u32 %v801, 2147483648
        %v821 = vor.u32 1.1754944e-38, %v820
        %v822 = vsel %vm819, %v821, %v817
        %v823 = vmul.f32 1.0, %v822
        %v824 = vrcp.pop %v802
        %v825 = vmul.f32 %v802, %v824
        %v826 = vsub.f32 1.0, %v825
        %v827 = vmul.f32 %v824, %v826
        %v828 = vadd.f32 %v824, %v827
        %vm829 = vweird.f32 %v802
        %vm830 = vweird.f32 %v824
        %vm831 = vmor %vm829, %vm830
        %v832 = vsel %vm831, %v824, %v828
        %v833 = vand.u32 2147483647, %v802
        %vm834 = vcmp.eq.f32.partialorder %v833, 8.507059e+37
        %v835 = vand.u32 %v802, 2147483648
        %v836 = vor.u32 1.1754944e-38, %v835
        %v837 = vsel %vm834, %v836, %v832
        %v838 = vmul.f32 1.0, %v837
        %v839 = vrcp.pop %v803
        %v840 = vmul.f32 %v803, %v839
        %v841 = vsub.f32 1.0, %v840
        %v842 = vmul.f32 %v839, %v841
        %v843 = vadd.f32 %v839, %v842
        %vm844 = vweird.f32 %v803
        %vm845 = vweird.f32 %v839
        %vm846 = vmor %vm844, %vm845
        %v847 = vsel %vm846, %v839, %v843
        %v848 = vand.u32 2147483647, %v803
        %vm849 = vcmp.eq.f32.partialorder %v848, 8.507059e+37
        %v850 = vand.u32 %v803, 2147483648
        %v851 = vor.u32 1.1754944e-38, %v850
        %v852 = vsel %vm849, %v851, %v847
        %v853 = vmul.f32 1.0, %v852
        %v854 = vrcp.pop %v804
        %v855 = vmul.f32 %v804, %v854
        %v856 = vsub.f32 1.0, %v855
        %v857 = vmul.f32 %v854, %v856
        %v858 = vadd.f32 %v854, %v857
        %vm859 = vweird.f32 %v804
        %vm860 = vweird.f32 %v854
        %vm861 = vmor %vm859, %vm860
        %v862 = vsel %vm861, %v854, %v858
        %v863 = vand.u32 2147483647, %v804
        %vm864 = vcmp.eq.f32.partialorder %v863, 8.507059e+37
        %v865 = vand.u32 %v804, 2147483648
        %v866 = vor.u32 1.1754944e-38, %v865
        %v867 = vsel %vm864, %v866, %v862
        %v868 = vmul.f32 1.0, %v867
        %v869 = vrcp.pop %v805
        %v870 = vmul.f32 %v805, %v869
        %v871 = vsub.f32 1.0, %v870
        %v872 = vmul.f32 %v869, %v871
        %v873 = vadd.f32 %v869, %v872
        %vm874 = vweird.f32 %v805
        %vm875 = vweird.f32 %v869
        %vm876 = vmor %vm874, %vm875
        %v877 = vsel %vm876, %v869, %v873
        %v878 = vand.u32 2147483647, %v805
        %vm879 = vcmp.eq.f32.partialorder %v878, 8.507059e+37
        %v880 = vand.u32 %v805, 2147483648
        %v881 = vor.u32 1.1754944e-38, %v880
        %v882 = vsel %vm879, %v881, %v877
        %v883 = vmul.f32 1.0, %v882
        %v884 = vrcp.pop %v806
        %v885 = vmul.f32 %v806, %v884
        %v886 = vsub.f32 1.0, %v885
        %v887 = vmul.f32 %v884, %v886
        %v888 = vadd.f32 %v884, %v887
        %vm889 = vweird.f32 %v806
        %vm890 = vweird.f32 %v884
        %vm891 = vmor %vm889, %vm890
        %v892 = vsel %vm891, %v884, %v888
        %v893 = vand.u32 2147483647, %v806
        %vm894 = vcmp.eq.f32.partialorder %v893, 8.507059e+37
        %v895 = vand.u32 %v806, 2147483648
        %v896 = vor.u32 1.1754944e-38, %v895
        %v897 = vsel %vm894, %v896, %v892
        %v898 = vmul.f32 1.0, %v897
        %v899 = vrcp.pop %v807
        %v900 = vmul.f32 %v807, %v899
        %v901 = vsub.f32 1.0, %v900
        %v902 = vmul.f32 %v899, %v901
        %v903 = vadd.f32 %v899, %v902
        %vm904 = vweird.f32 %v807
        %vm905 = vweird.f32 %v899
        %vm906 = vmor %vm904, %vm905
        %v907 = vsel %vm906, %v899, %v903
        %v908 = vand.u32 2147483647, %v807
        %vm909 = vcmp.eq.f32.partialorder %v908, 8.507059e+37
        %v910 = vand.u32 %v807, 2147483648
        %v911 = vor.u32 1.1754944e-38, %v910
        %v912 = vsel %vm909, %v911, %v907
        %v913 = vmul.f32 1.0, %v912
        %v914 = vrcp.pop %v808
        %v915 = vmul.f32 %v808, %v914
        %v916 = vsub.f32 1.0, %v915
        %v917 = vmul.f32 %v914, %v916
        %v918 = vadd.f32 %v914, %v917
        %vm919 = vweird.f32 %v808
        %vm920 = vweird.f32 %v914
        %vm921 = vmor %vm919, %vm920
        %v922 = vsel %vm921, %v914, %v918
        %v923 = vand.u32 2147483647, %v808
        %vm924 = vcmp.eq.f32.partialorder %v923, 8.507059e+37
        %v925 = vand.u32 %v808, 2147483648
        %v926 = vor.u32 1.1754944e-38, %v925
        %v927 = vsel %vm924, %v926, %v922
        %v928 = vmul.f32 1.0, %v927
        %v929 = vmul.f32 %v760, %v823
        %v930 = vmul.f32 %v761, %v838
        %v931 = vmul.f32 %v762, %v853
        %v932 = vmul.f32 %v763, %v868
        %v933 = vmul.f32 %v764, %v883
        %v934 = vmul.f32 %v765, %v898
        %v935 = vmul.f32 %v766, %v913
        %v936 = vmul.f32 %v767, %v928
        %v937 = vld [vmem:[%s377 + $0x7] sm:$0x1]
        %v938 = vld [vmem:[%s393] sm:$0x1]
        %v940 = vrot.slane %v938, 7
        %vm942 = vcmask 1040384
        %v943 = vsel %vm942, %v937, %v940
        %vm944 = vcmask 1041408
        %v945 = vsel %vm944, %v943, 0.0
        %946 = vadd.xlane.f32.xlu0 %v945
        %v947 = vpop.xlane.xlu0 %946
        %v948 = vmul.f32 %v947, %v438
        %v949 = vsub.f32 %v943, %v948
        %v950 = vmul.f32 %v949, %v949
        %v951 = vsel %vm944, %v950, 0.0
        %952 = vadd.xlane.f32.xlu0 %v951
        %v953 = vpop.xlane.xlu0 %952
        %v954 = vmul.f32 %v953, %v438
        %v955 = vadd.f32 %v954, 1e-05
        %v956 = vrsqrt.pop %v955
        %v957 = vmul.f32 %v956, %v955
        %v958 = vmul.f32 %v957, %v956
        %v959 = vmul.f32 0.5, %v958
        %v960 = vsub.f32 1.5, %v959
        %v961 = vmul.f32 %v956, %v960
        %vm962 = vweird.f32 %v955
        %vm963 = vweird.f32 %v956
        %vm964 = vmor %vm962, %vm963
        %v965 = vsel %vm964, %v956, %v961
        %v966 = vmul.f32 %v949, %v965
        %v967 = vmul.f32 %v966, %v583
        %v968 = vadd.f32 %v967, %v592
        %v969 = vpack.c.bf16 %v968, %v968
        %970 = vmatpush.bf16.msra.mxu0 %v683
        %971 = vmatpush.bf16.msra.mxu0 %v681
        %972 = vmatpush.bf16.msra.mxu0 %v679
        %973 = vmatpush.bf16.msra.mxu0 %v677
        %974 = vmatpush.bf16.msra.mxu0 %v675
        %975 = vmatpush.bf16.msra.mxu0 %v673
        %976 = vmatpush.bf16.msra.mxu0 %v671
        %977 = vmatpush.bf16.msra.mxu0 %v669
        %978 = vmatmul.bf16.gmra.mxu0 %v969
        %v979 = vpop.f32.mrf.mxu0
        %v980 = vadd.f32 0.0, %v979
        %v981 = vpop.f32.mrf.mxu0
        %982 = vdwg.mxu0
        %983 = vmatpush.bf16.msra.mxu0 %v684
        %984 = vmatpush.bf16.msra.mxu0 %v682
        %985 = vmatpush.bf16.msra.mxu0 %v680
        %986 = vmatpush.bf16.msra.mxu0 %v678
        %987 = vmatpush.bf16.msra.mxu0 %v676
        %988 = vmatpush.bf16.msra.mxu0 %v674
        %989 = vmatpush.bf16.msra.mxu0 %v672
        %990 = vmatpush.bf16.msra.mxu0 %v670
        %991 = vmatmul.bf16.gmra.mxu0 %v969
        %v992 = vpop.f32.mrf.mxu0
        %v993 = vadd.f32 0.0, %v992
        %v994 = vpop.f32.mrf.mxu0
        %995 = vdwg.mxu0
        %v996 = vadd.f32 %v980, %v759
        %v997 = vadd.f32 %v993, %v768
        %v998 = vxor.u32 %v997, 2147483648
        %v999 = vmul.f32 %v998, 1.442695
        %v1000 = vpow.pop %v999
        %v1001 = vadd.f32 %v1000, 1.0
        %v1002 = vrcp.pop %v1001
        %v1003 = vmul.f32 %v1001, %v1002
        %v1004 = vsub.f32 1.0, %v1003
        %v1005 = vmul.f32 %v1002, %v1004
        %v1006 = vadd.f32 %v1002, %v1005
        %vm1007 = vweird.f32 %v1001
        %vm1008 = vweird.f32 %v1002
        %vm1009 = vmor %vm1007, %vm1008
        %v1010 = vsel %vm1009, %v1002, %v1006
        %v1011 = vand.u32 2147483647, %v1001
        %vm1012 = vcmp.eq.f32.partialorder %v1011, 8.507059e+37
        %v1013 = vand.u32 %v1001, 2147483648
        %v1014 = vor.u32 1.1754944e-38, %v1013
        %v1015 = vsel %vm1012, %v1014, %v1010
        %v1016 = vmul.f32 1.0, %v1015
        %v1017 = vmul.f32 %v996, %v1016
        %p1018 = scmp.gt.s32.totalorder %s25, 0
        %s1019 = scalar_select %p1018, 1, 0
        %s1020 = scvt.s32.f32 %s1019
        %p1021 = scmp.lt.s32.totalorder %s25, 1
        %s1022 = scalar_select %p1021, 1, 0
        %s1023 = scvt.s32.f32 %s1022
        %v1024 = vstv %s1020
        %v1025 = vmul.f32 %v1017, %v1024
        %v1026 = vstv %s1023
        %v1027 = vmul.f32 %v1017, %v1026
        %v1028 = vlaneseq
        %v1029 = vshrl.u32 %v1028, 7
        %v1030 = vadd.s32 %v1029, 8
        %v1031 = vadd.s32 %v1029, 16
        %v1032 = vadd.s32 %v1029, 24
        %v1033 = vadd.s32 %v1029, 32
        %v1034 = vadd.s32 %v1029, 40
        %v1035 = vadd.s32 %v1029, 48
        %v1036 = vadd.s32 %v1029, 56
        %vm1037 = vcmp.eq.s32.totalorder %v1029, 0
        %vm1038 = vcmp.eq.s32.totalorder %v1030, 0
        %vm1039 = vcmp.eq.s32.totalorder %v1031, 0
        %vm1040 = vcmp.eq.s32.totalorder %v1032, 0
        %vm1041 = vcmp.eq.s32.totalorder %v1033, 0
        %vm1042 = vcmp.eq.s32.totalorder %v1034, 0
        %vm1043 = vcmp.eq.s32.totalorder %v1035, 0
        %vm1044 = vcmp.eq.s32.totalorder %v1036, 0
        %v1045 = vrot.slane %v929, 7
        %v1046 = vrot.slane %v930, 7
        %v1047 = vrot.slane %v931, 7
        %v1048 = vrot.slane %v932, 7
        %v1049 = vrot.slane %v933, 7
        %v1050 = vrot.slane %v934, 7
        %v1051 = vrot.slane %v935, 7
        %v1052 = vrot.slane %v936, 7
        %vm1053 = vcmp.lt.s32.totalorder %v1029, 1
        %v1054 = vsel %vm1053, %v1051, %v1052
        %v1055 = vsel %vm1053, %v1050, %v1051
        %v1056 = vsel %vm1053, %v1049, %v1050
        %v1057 = vsel %vm1053, %v1048, %v1049
        %v1058 = vsel %vm1053, %v1047, %v1048
        %v1059 = vsel %vm1053, %v1046, %v1047
        %v1060 = vsel %vm1053, %v1045, %v1046
        %v1061 = vsel %vm1053, %v1052, %v1045
        %v1062 = vsel %vm1037, 1, 0
        %v1063 = vsel %vm1038, 1, 0
        %v1064 = vsel %vm1039, 1, 0
        %v1065 = vsel %vm1040, 1, 0
        %v1066 = vsel %vm1041, 1, 0
        %v1067 = vsel %vm1042, 1, 0
        %v1068 = vsel %vm1043, 1, 0
        %v1069 = vsel %vm1044, 1, 0
        %vm1070 = vcmp.eq.s32.totalorder %v1062, 1
        %vm1071 = vcmp.eq.s32.totalorder %v1063, 1
        %vm1072 = vcmp.eq.s32.totalorder %v1064, 1
        %vm1073 = vcmp.eq.s32.totalorder %v1065, 1
        %vm1074 = vcmp.eq.s32.totalorder %v1066, 1
        %vm1075 = vcmp.eq.s32.totalorder %v1067, 1
        %vm1076 = vcmp.eq.s32.totalorder %v1068, 1
        %vm1077 = vcmp.eq.s32.totalorder %v1069, 1
        %v1078 = vperm.slane %v1025, 0
        %v1079 = vsel %vm1070, %v1078, %v1061
        %v1080 = vsel %vm1071, %v1078, %v1060
        %v1081 = vsel %vm1072, %v1078, %v1059
        %v1082 = vsel %vm1073, %v1078, %v1058
        %v1083 = vsel %vm1074, %v1078, %v1057
        %v1084 = vsel %vm1075, %v1078, %v1056
        %v1085 = vsel %vm1076, %v1078, %v1055
        %v1086 = vsel %vm1077, %v1078, %v1054
        %vm1087 = vcmp.eq.s32.totalorder %v1029, 63
        %vm1088 = vcmp.eq.s32.totalorder %v1030, 63
        %vm1089 = vcmp.eq.s32.totalorder %v1031, 63
        %vm1090 = vcmp.eq.s32.totalorder %v1032, 63
        %vm1091 = vcmp.eq.s32.totalorder %v1033, 63
        %vm1092 = vcmp.eq.s32.totalorder %v1034, 63
        %vm1093 = vcmp.eq.s32.totalorder %v1035, 63
        %vm1094 = vcmp.eq.s32.totalorder %v1036, 63
        %v1095 = vrot.slane %v929, 1
        %v1096 = vrot.slane %v930, 1
        %v1097 = vrot.slane %v931, 1
        %v1098 = vrot.slane %v932, 1
        %v1099 = vrot.slane %v933, 1
        %v1100 = vrot.slane %v934, 1
        %v1101 = vrot.slane %v935, 1
        %v1102 = vrot.slane %v936, 1
        %vm1103 = vcmp.lt.s32.totalorder %v1029, 7
        %v1104 = vsel %vm1103, %v1101, %v1102
        %v1105 = vsel %vm1103, %v1100, %v1101
        %v1106 = vsel %vm1103, %v1099, %v1100
        %v1107 = vsel %vm1103, %v1098, %v1099
        %v1108 = vsel %vm1103, %v1097, %v1098
        %v1109 = vsel %vm1103, %v1096, %v1097
        %v1110 = vsel %vm1103, %v1095, %v1096
        %v1111 = vsel %vm1103, %v1102, %v1095
        %v1112 = vsel %vm1087, 1, 0
        %v1113 = vsel %vm1088, 1, 0
        %v1114 = vsel %vm1089, 1, 0
        %v1115 = vsel %vm1090, 1, 0
        %v1116 = vsel %vm1091, 1, 0
        %v1117 = vsel %vm1092, 1, 0
        %v1118 = vsel %vm1093, 1, 0
        %v1119 = vsel %vm1094, 1, 0
        %vm1120 = vcmp.eq.s32.totalorder %v1112, 1
        %vm1121 = vcmp.eq.s32.totalorder %v1113, 1
        %vm1122 = vcmp.eq.s32.totalorder %v1114, 1
        %vm1123 = vcmp.eq.s32.totalorder %v1115, 1
        %vm1124 = vcmp.eq.s32.totalorder %v1116, 1
        %vm1125 = vcmp.eq.s32.totalorder %v1117, 1
        %vm1126 = vcmp.eq.s32.totalorder %v1118, 1
        %vm1127 = vcmp.eq.s32.totalorder %v1119, 1
        %v1128 = vperm.slane %v1027, 1
        %v1129 = vsel %vm1120, %v1128, %v1110
        %v1130 = vsel %vm1121, %v1128, %v1109
        %v1131 = vsel %vm1122, %v1128, %v1108
        %v1132 = vsel %vm1123, %v1128, %v1107
        %v1133 = vsel %vm1124, %v1128, %v1106
        %v1134 = vsel %vm1125, %v1128, %v1105
        %v1135 = vsel %vm1126, %v1128, %v1104
        %v1136 = vsel %vm1127, %v1128, %v1111
        %v1137 = vperm.slane %v403, 0
        %v1138 = vmul.f32 %v1079, %v1137
        %v1139 = vmul.f32 %v1080, %v1137
        %v1140 = vmul.f32 %v1081, %v1137
        %v1141 = vmul.f32 %v1082, %v1137
        %v1142 = vmul.f32 %v1083, %v1137
        %v1143 = vmul.f32 %v1084, %v1137
        %v1144 = vmul.f32 %v1085, %v1137
        %v1145 = vmul.f32 %v1086, %v1137
        %v1146 = vperm.slane %v404, 0
        %v1147 = vmul.f32 %v929, %v1146
        %v1148 = vmul.f32 %v930, %v1146
        %v1149 = vmul.f32 %v931, %v1146
        %v1150 = vmul.f32 %v932, %v1146
        %v1151 = vmul.f32 %v933, %v1146
        %v1152 = vmul.f32 %v934, %v1146
        %v1153 = vmul.f32 %v935, %v1146
        %v1154 = vmul.f32 %v936, %v1146
        %v1155 = vadd.f32 %v1138, %v1147
        %v1156 = vadd.f32 %v1139, %v1148
        %v1157 = vadd.f32 %v1140, %v1149
        %v1158 = vadd.f32 %v1141, %v1150
        %v1159 = vadd.f32 %v1142, %v1151
        %v1160 = vadd.f32 %v1143, %v1152
        %v1161 = vadd.f32 %v1144, %v1153
        %v1162 = vadd.f32 %v1145, %v1154
        %v1163 = vperm.slane %v405, 0
        %v1164 = vmul.f32 %v1129, %v1163
        %v1165 = vmul.f32 %v1130, %v1163
        %v1166 = vmul.f32 %v1131, %v1163
        %v1167 = vmul.f32 %v1132, %v1163
        %v1168 = vmul.f32 %v1133, %v1163
        %v1169 = vmul.f32 %v1134, %v1163
        %v1170 = vmul.f32 %v1135, %v1163
        %v1171 = vmul.f32 %v1136, %v1163
        %v1172 = vadd.f32 %v1155, %v1164
        %v1173 = vadd.f32 %v1156, %v1165
        %v1174 = vadd.f32 %v1157, %v1166
        %v1175 = vadd.f32 %v1158, %v1167
        %v1176 = vadd.f32 %v1159, %v1168
        %v1177 = vadd.f32 %v1160, %v1169
        %v1178 = vadd.f32 %v1161, %v1170
        %v1179 = vadd.f32 %v1162, %v1171
        %v1180 = vperm.slane %v406, 0
        %v1181 = vadd.f32 %v1172, %v1180
        %v1182 = vadd.f32 %v1173, %v1180
        %v1183 = vadd.f32 %v1174, %v1180
        %v1184 = vadd.f32 %v1175, %v1180
        %v1185 = vadd.f32 %v1176, %v1180
        %v1186 = vadd.f32 %v1177, %v1180
        %v1187 = vadd.f32 %v1178, %v1180
        %v1188 = vadd.f32 %v1179, %v1180
        %v1189 = vxor.u32 %v1181, 2147483648
        %v1190 = vxor.u32 %v1182, 2147483648
        %v1191 = vxor.u32 %v1183, 2147483648
        %v1192 = vxor.u32 %v1184, 2147483648
        %v1193 = vxor.u32 %v1185, 2147483648
        %v1194 = vxor.u32 %v1186, 2147483648
        %v1195 = vxor.u32 %v1187, 2147483648
        %v1196 = vxor.u32 %v1188, 2147483648
        %v1197 = vmul.f32 %v1189, 1.442695
        %v1198 = vpow.pop %v1197
        %v1199 = vmul.f32 %v1190, 1.442695
        %v1200 = vpow.pop %v1199
        %v1201 = vmul.f32 %v1191, 1.442695
        %v1202 = vpow.pop %v1201
        %v1203 = vmul.f32 %v1192, 1.442695
        %v1204 = vpow.pop %v1203
        %v1205 = vmul.f32 %v1193, 1.442695
        %v1206 = vpow.pop %v1205
        %v1207 = vmul.f32 %v1194, 1.442695
        %v1208 = vpow.pop %v1207
        %v1209 = vmul.f32 %v1195, 1.442695
        %v1210 = vpow.pop %v1209
        %v1211 = vmul.f32 %v1196, 1.442695
        %v1212 = vpow.pop %v1211
        %v1213 = vadd.f32 %v1198, 1.0
        %v1214 = vadd.f32 %v1200, 1.0
        %v1215 = vadd.f32 %v1202, 1.0
        %v1216 = vadd.f32 %v1204, 1.0
        %v1217 = vadd.f32 %v1206, 1.0
        %v1218 = vadd.f32 %v1208, 1.0
        %v1219 = vadd.f32 %v1210, 1.0
        %v1220 = vadd.f32 %v1212, 1.0
        %v1221 = vrcp.pop %v1213
        %v1222 = vmul.f32 %v1213, %v1221
        %v1223 = vsub.f32 1.0, %v1222
        %v1224 = vmul.f32 %v1221, %v1223
        %v1225 = vadd.f32 %v1221, %v1224
        %vm1226 = vweird.f32 %v1213
        %vm1227 = vweird.f32 %v1221
        %vm1228 = vmor %vm1226, %vm1227
        %v1229 = vsel %vm1228, %v1221, %v1225
        %v1230 = vand.u32 2147483647, %v1213
        %vm1231 = vcmp.eq.f32.partialorder %v1230, 8.507059e+37
        %v1232 = vand.u32 %v1213, 2147483648
        %v1233 = vor.u32 1.1754944e-38, %v1232
        %v1234 = vsel %vm1231, %v1233, %v1229
        %v1235 = vmul.f32 1.0, %v1234
        %v1236 = vrcp.pop %v1214
        %v1237 = vmul.f32 %v1214, %v1236
        %v1238 = vsub.f32 1.0, %v1237
        %v1239 = vmul.f32 %v1236, %v1238
        %v1240 = vadd.f32 %v1236, %v1239
        %vm1241 = vweird.f32 %v1214
        %vm1242 = vweird.f32 %v1236
        %vm1243 = vmor %vm1241, %vm1242
        %v1244 = vsel %vm1243, %v1236, %v1240
        %v1245 = vand.u32 2147483647, %v1214
        %vm1246 = vcmp.eq.f32.partialorder %v1245, 8.507059e+37
        %v1247 = vand.u32 %v1214, 2147483648
        %v1248 = vor.u32 1.1754944e-38, %v1247
        %v1249 = vsel %vm1246, %v1248, %v1244
        %v1250 = vmul.f32 1.0, %v1249
        %v1251 = vrcp.pop %v1215
        %v1252 = vmul.f32 %v1215, %v1251
        %v1253 = vsub.f32 1.0, %v1252
        %v1254 = vmul.f32 %v1251, %v1253
        %v1255 = vadd.f32 %v1251, %v1254
        %vm1256 = vweird.f32 %v1215
        %vm1257 = vweird.f32 %v1251
        %vm1258 = vmor %vm1256, %vm1257
        %v1259 = vsel %vm1258, %v1251, %v1255
        %v1260 = vand.u32 2147483647, %v1215
        %vm1261 = vcmp.eq.f32.partialorder %v1260, 8.507059e+37
        %v1262 = vand.u32 %v1215, 2147483648
        %v1263 = vor.u32 1.1754944e-38, %v1262
        %v1264 = vsel %vm1261, %v1263, %v1259
        %v1265 = vmul.f32 1.0, %v1264
        %v1266 = vrcp.pop %v1216
        %v1267 = vmul.f32 %v1216, %v1266
        %v1268 = vsub.f32 1.0, %v1267
        %v1269 = vmul.f32 %v1266, %v1268
        %v1270 = vadd.f32 %v1266, %v1269
        %vm1271 = vweird.f32 %v1216
        %vm1272 = vweird.f32 %v1266
        %vm1273 = vmor %vm1271, %vm1272
        %v1274 = vsel %vm1273, %v1266, %v1270
        %v1275 = vand.u32 2147483647, %v1216
        %vm1276 = vcmp.eq.f32.partialorder %v1275, 8.507059e+37
        %v1277 = vand.u32 %v1216, 2147483648
        %v1278 = vor.u32 1.1754944e-38, %v1277
        %v1279 = vsel %vm1276, %v1278, %v1274
        %v1280 = vmul.f32 1.0, %v1279
        %v1281 = vrcp.pop %v1217
        %v1282 = vmul.f32 %v1217, %v1281
        %v1283 = vsub.f32 1.0, %v1282
        %v1284 = vmul.f32 %v1281, %v1283
        %v1285 = vadd.f32 %v1281, %v1284
        %vm1286 = vweird.f32 %v1217
        %vm1287 = vweird.f32 %v1281
        %vm1288 = vmor %vm1286, %vm1287
        %v1289 = vsel %vm1288, %v1281, %v1285
        %v1290 = vand.u32 2147483647, %v1217
        %vm1291 = vcmp.eq.f32.partialorder %v1290, 8.507059e+37
        %v1292 = vand.u32 %v1217, 2147483648
        %v1293 = vor.u32 1.1754944e-38, %v1292
        %v1294 = vsel %vm1291, %v1293, %v1289
        %v1295 = vmul.f32 1.0, %v1294
        %v1296 = vrcp.pop %v1218
        %v1297 = vmul.f32 %v1218, %v1296
        %v1298 = vsub.f32 1.0, %v1297
        %v1299 = vmul.f32 %v1296, %v1298
        %v1300 = vadd.f32 %v1296, %v1299
        %vm1301 = vweird.f32 %v1218
        %vm1302 = vweird.f32 %v1296
        %vm1303 = vmor %vm1301, %vm1302
        %v1304 = vsel %vm1303, %v1296, %v1300
        %v1305 = vand.u32 2147483647, %v1218
        %vm1306 = vcmp.eq.f32.partialorder %v1305, 8.507059e+37
        %v1307 = vand.u32 %v1218, 2147483648
        %v1308 = vor.u32 1.1754944e-38, %v1307
        %v1309 = vsel %vm1306, %v1308, %v1304
        %v1310 = vmul.f32 1.0, %v1309
        %v1311 = vrcp.pop %v1219
        %v1312 = vmul.f32 %v1219, %v1311
        %v1313 = vsub.f32 1.0, %v1312
        %v1314 = vmul.f32 %v1311, %v1313
        %v1315 = vadd.f32 %v1311, %v1314
        %vm1316 = vweird.f32 %v1219
        %vm1317 = vweird.f32 %v1311
        %vm1318 = vmor %vm1316, %vm1317
        %v1319 = vsel %vm1318, %v1311, %v1315
        %v1320 = vand.u32 2147483647, %v1219
        %vm1321 = vcmp.eq.f32.partialorder %v1320, 8.507059e+37
        %v1322 = vand.u32 %v1219, 2147483648
        %v1323 = vor.u32 1.1754944e-38, %v1322
        %v1324 = vsel %vm1321, %v1323, %v1319
        %v1325 = vmul.f32 1.0, %v1324
        %v1326 = vrcp.pop %v1220
        %v1327 = vmul.f32 %v1220, %v1326
        %v1328 = vsub.f32 1.0, %v1327
        %v1329 = vmul.f32 %v1326, %v1328
        %v1330 = vadd.f32 %v1326, %v1329
        %vm1331 = vweird.f32 %v1220
        %vm1332 = vweird.f32 %v1326
        %vm1333 = vmor %vm1331, %vm1332
        %v1334 = vsel %vm1333, %v1326, %v1330
        %v1335 = vand.u32 2147483647, %v1220
        %vm1336 = vcmp.eq.f32.partialorder %v1335, 8.507059e+37
        %v1337 = vand.u32 %v1220, 2147483648
        %v1338 = vor.u32 1.1754944e-38, %v1337
        %v1339 = vsel %vm1336, %v1338, %v1334
        %v1340 = vmul.f32 1.0, %v1339
        %v1341 = vmul.f32 %v1181, %v1235
        %v1342 = vmul.f32 %v1182, %v1250
        %v1343 = vmul.f32 %v1183, %v1265
        %v1344 = vmul.f32 %v1184, %v1280
        %v1345 = vmul.f32 %v1185, %v1295
        %v1346 = vmul.f32 %v1186, %v1310
        %v1347 = vmul.f32 %v1187, %v1325
        %v1348 = vmul.f32 %v1188, %v1340
        %v1349 = vpack.c.bf16 %v1342, %v1341
        %v1350 = vpack.c.bf16 %v1344, %v1343
        %v1351 = vpack.c.bf16 %v1346, %v1345
        %v1352 = vpack.c.bf16 %v1348, %v1347
        %v1353 = vld [vmem:[%s5] sm:$0xf]
        %v1354 = vld [vmem:[%s5 + $0x4] sm:$0xf]
        %v1355 = vld [vmem:[%s5 + $0x8] sm:$0xf]
        %v1356 = vld [vmem:[%s5 + $0xc] sm:$0xf]
        %v1357 = vld [vmem:[%s5 + $0x10] sm:$0xf]
        %v1358 = vld [vmem:[%s5 + $0x14] sm:$0xf]
        %v1359 = vld [vmem:[%s5 + $0x18] sm:$0xf]
        %v1360 = vld [vmem:[%s5 + $0x1c] sm:$0xf]
        %v1361 = vld [vmem:[%s5 + $0x20] sm:$0xf]
        %v1362 = vld [vmem:[%s5 + $0x24] sm:$0xf]
        %v1363 = vld [vmem:[%s5 + $0x28] sm:$0xf]
        %v1364 = vld [vmem:[%s5 + $0x2c] sm:$0xf]
        %v1365 = vld [vmem:[%s5 + $0x30] sm:$0xf]
        %v1366 = vld [vmem:[%s5 + $0x34] sm:$0xf]
        %v1367 = vld [vmem:[%s5 + $0x38] sm:$0xf]
        %v1368 = vld [vmem:[%s5 + $0x3c] sm:$0xf]
        %v1369 = vperm.slane %v407, 0
        %v1386 = vunpack.c.l.b16 %v1353
        %v1387 = vunpack.c.l.b16 %v1354
        %v1388 = vunpack.c.l.b16 %v1355
        %v1389 = vunpack.c.l.b16 %v1356
        %v1390 = vunpack.c.l.b16 %v1357
        %v1391 = vunpack.c.l.b16 %v1358
        %v1392 = vunpack.c.l.b16 %v1359
        %v1393 = vunpack.c.l.b16 %v1360
        %v1394 = vunpack.c.l.b16 %v1361
        %v1395 = vunpack.c.l.b16 %v1362
        %v1396 = vunpack.c.l.b16 %v1363
        %v1397 = vunpack.c.l.b16 %v1364
        %v1398 = vunpack.c.l.b16 %v1365
        %v1399 = vunpack.c.l.b16 %v1366
        %v1400 = vunpack.c.l.b16 %v1367
        %v1401 = vunpack.c.l.b16 %v1368
        %v1402 = vpack.c.b16 %v1387, %v1386
        %v1403 = vpack.c.b16 %v1389, %v1388
        %v1404 = vpack.c.b16 %v1391, %v1390
        %v1405 = vpack.c.b16 %v1393, %v1392
        %v1406 = vpack.c.b16 %v1395, %v1394
        %v1407 = vpack.c.b16 %v1397, %v1396
        %v1408 = vpack.c.b16 %v1399, %v1398
        %v1409 = vpack.c.b16 %v1401, %v1400
        %1418 = vmatpush.bf16.msra.mxu0 %v1409
        %1419 = vmatpush.bf16.msra.mxu0 %v1408
        %1420 = vmatpush.bf16.msra.mxu0 %v1407
        %1421 = vmatpush.bf16.msra.mxu0 %v1406
        %1422 = vmatpush.bf16.msra.mxu0 %v1405
        %1423 = vmatpush.bf16.msra.mxu0 %v1404
        %1424 = vmatpush.bf16.msra.mxu0 %v1403
        %1425 = vmatpush.bf16.msra.mxu0 %v1402
        %1426 = vmatmul.bf16.gmra.mxu0 %v1349
        %v1427 = vpop.f32.mrf.mxu0
        %v1428 = vadd.f32 %v1369, %v1427
        %v1429 = vpop.f32.mrf.mxu0
        %v1430 = vadd.f32 %v1369, %v1429
        %1431 = vmatmul.bf16.gmra.mxu0 %v1350
        %v1432 = vpop.f32.mrf.mxu0
        %v1433 = vadd.f32 %v1369, %v1432
        %v1434 = vpop.f32.mrf.mxu0
        %v1435 = vadd.f32 %v1369, %v1434
        %1436 = vmatmul.bf16.gmra.mxu0 %v1351
        %v1437 = vpop.f32.mrf.mxu0
        %v1438 = vadd.f32 %v1369, %v1437
        %v1439 = vpop.f32.mrf.mxu0
        %v1440 = vadd.f32 %v1369, %v1439
        %1441 = vmatmul.bf16.gmra.mxu0 %v1352
        %v1442 = vpop.f32.mrf.mxu0
        %v1443 = vadd.f32 %v1369, %v1442
        %v1444 = vpop.f32.mrf.mxu0
        %v1445 = vadd.f32 %v1369, %v1444
        %1446 = vdwg.mxu0
        %1447 = vst [vmem:[%s355] sm:$0xff] %v1428
        %1448 = vst [vmem:[%s355 + $0x8] sm:$0xff] %v1430
        %1449 = vst [vmem:[%s355 + $0x10] sm:$0xff] %v1433
        %1450 = vst [vmem:[%s355 + $0x18] sm:$0xff] %v1435
        %1451 = vst [vmem:[%s355 + $0x20] sm:$0xff] %v1438
        %1452 = vst [vmem:[%s355 + $0x28] sm:$0xff] %v1440
        %1453 = vst [vmem:[%s355 + $0x30] sm:$0xff] %v1443
        %1454 = vst [vmem:[%s355 + $0x38] sm:$0xff] %v1445
        %s1455 = sand.u32 %s205, 1
        %s1456 = scalar_lea.sflag [#allocation3], %s1455
        %s1457 = sand.u32 %s205, 1
        %s1458 = smul.addr %s1457, 64
        %s1459 = scalar_lea.vmem [#allocation2], %s1458
        // Predicated region
        $region45: #{conv_module_forward.1} parent=43 // pred_check
          %p1460 = pneg %p215
        $region46: #{conv_module_forward.1} parent=43 // pred_check_branch
          %1462 = sbr.rel (%p1460) target = $region48
        $region47: #{conv_module_forward.1} parent=43 // pred_region
          %s1463 = smul.u32 8, %s25
          %1465 = vsyncadd %s1456, 0
          %s1466 = smul.addr %s24, 16
          %s1467 = sadd.s32 %s1463, %s1466
          %s1468 = smul.addr %s1467, 8
          %s1469 = scalar_lea.hbm %s6, %s1468
          %s1470 = sshll.u32 %s1459, 4
          %s1471 = int_to_ptr.vmem [resolvable:$true] %s1470
          %s1472 = sshll.u32 %s1469, 4
          %s1473 = int_to_ptr.hbm [resolvable:$true] %s1472
          %1478 = dma.vmem_to_hbm [thread:$0]  %s1471, 1024, %s1473, %s1456, 128, 128, 8
        $region48: #{conv_module_forward.1} parent=43 // pred_fallthru
          _
      $region44: #{conv_module_forward.1} parent=5 // pred_fallthru
        _
      %p1479 = scmp.le.s32.totalorder 2, %s15
      // Predicated region
      $region49: #{conv_module_forward.1} parent=5 // pred_check
        %p1480 = pneg %p1479
      $region50: #{conv_module_forward.1} parent=5 // pred_check_branch
        %1482 = sbr.rel (%p1480) target = $region52
      $region51: #{conv_module_forward.1} parent=5 // pred_region
        %s1483 = ssub.s32 %s15, 2
        // Predicated region
        $region53: #{conv_module_forward.1} parent=51 // pred_check
          %p1484 = pneg %p221
        $region54: #{conv_module_forward.1} parent=51 // pred_check_branch
          %1486 = sbr.rel (%p1484) target = $region56
        $region55: #{conv_module_forward.1} parent=51 // pred_region
          %s1487 = sand.u32 %s206, 1
          %s1488 = scalar_lea.sflag [#allocation3], %s1487
          %s1489 = sand.u32 %s206, 1
          %s1490 = smul.addr %s1489, 64
          %s1491 = scalar_lea.vmem [#allocation2], %s1490
          %1493 = dma.done %s1488, 1024
        $region56: #{conv_module_forward.1} parent=51 // pred_fallthru
          _
      $region52: #{conv_module_forward.1} parent=5 // pred_fallthru
        _
    $region6: #{conv_module_forward.1} parent=1 // loop_footer
      %s19 = sadd.s32 1, %s15
    $region7: #{conv_module_forward.1} parent=1 // loop_footer_branch
      %14 = sbr.rel target = $region3
    $region8: #{conv_module_forward.1} parent=1 // loop_exit
      _
    %1494 = vsyncpa [#allocation3], 1
    %s1495 = scalar_lea.sflag [#allocation3], 1
    %1496 = vsyncpa %s1495, 1

</llo_original>
